<compile_context>
chip_gen: v7x
topology: tpu7x:2x2x1
jax: 0.10.0
libtpu: 0.0.40
codegen_flags: <defaults>
</compile_context>

<pallas_src>
import functools

import jax
import jax.numpy as jnp
from jax.experimental import pallas as pl
from jax.experimental.pallas import tpu as pltpu


def _ffm_kernel(idx_ref, w_ref, bias_ref, out_ref, *, num_fields, embed_dim):
    # idx_ref  : (F, TB)  int32  -- offset feature ids, batch on the lane axis.
    # w_ref    : (R, VP)  bf16   -- combined weights; row t*D+d = table t, dim d;
    #                               row F*D = linear ("fc") weights; zero-padded.
    # bias_ref : (1,)     f32    -- linear bias (SMEM scalar).
    # out_ref  : (1, TB)  f32    -- sigmoid(linear + ffm_term), lane-dense store.
    F = num_fields
    D = embed_dim
    FD = F * D
    _, VP = w_ref.shape
    _, TB = idx_ref.shape

    w = w_ref[...]                                              # (R, VP) bf16
    idx = idx_ref[...]                                          # (F, TB) int32
    iota = jax.lax.broadcasted_iota(jnp.int32, (VP, TB), 0)     # vocab ids on sublanes

    # In-kernel gather: for each field f, one-hot(idx[:, f]) matmul against all
    # tables at once -> gathered[f][t*D+d, b] = W[t, idx[b, f], d]  (f32, exact).
    gathered = []
    for f in range(F):
        onehot = (iota == idx[f][None, :]).astype(jnp.bfloat16)        # (VP, TB)
        gathered.append(
            jnp.dot(w, onehot, preferred_element_type=jnp.float32))    # (R, TB) f32

    # Linear (order-1) term: fc row of each field's gather, plus bias.
    acc = bias_ref[0] + sum(g[FD:FD + 1, :] for g in gathered)         # (1, TB) f32

    # Pairwise field-aware interactions (i < j):  table_j[idx_i] . table_i[idx_j].
    for i in range(F - 1):
        for j in range(i + 1, F):
            prod = (gathered[i][j * D:(j + 1) * D, :]
                    * gathered[j][i * D:(i + 1) * D, :])                # (D, TB) f32
            acc = acc + jnp.sum(prod, axis=0, keepdims=True)

    out_ref[...] = jax.nn.sigmoid(acc)


@functools.partial(jax.jit, static_argnames=("tb",))
def ffm_forward(x_idx, ffm_weights, fc_weight, bias, offsets, tb=4096):
    """x_idx: int (B, F). Returns f32 (B,) == sigmoid(linear(x) + ffm_term).

    tb: batch tile (lane) width; must be a multiple of 512.
    """
    B, F = x_idx.shape
    _, V, D = ffm_weights.shape
    FD = F * D

    idx = (x_idx + offsets[None, :]).astype(jnp.int32)                  # (B, F)

    # Combined, lane-padded weight matrix (cast to bf16 ONCE, before anything big).
    VP = pl.cdiv(V, 128) * 128
    R = pl.cdiv(FD + 1, 8) * 8
    w_emb = jnp.transpose(ffm_weights, (0, 2, 1)).reshape(FD, V)        # (F*D, V)
    w_comb = jnp.concatenate([w_emb, fc_weight.T], axis=0)              # (F*D+1, V)
    w_comb = jnp.pad(w_comb, ((0, R - (FD + 1)), (0, VP - V)))
    w_comb = w_comb.astype(jnp.bfloat16)                                # (R, VP)

    # Batch tiling: lane-dense tiles, multiple of 512, clamped so small batches get
    # one right-sized tile.  Only the int32 indices are padded (index 0 is valid).
    TB = min(tb, pl.cdiv(B, 512) * 512)
    B_pad = pl.cdiv(B, TB) * TB
    idx_t = idx.T                                                       # (F, B)
    if B_pad != B:
        idx_t = jnp.pad(idx_t, ((0, 0), (0, B_pad - B)))

    kern = functools.partial(_ffm_kernel, num_fields=F, embed_dim=D)

    out = pl.pallas_call(
        kern,
        out_shape=jax.ShapeDtypeStruct((1, B_pad), jnp.float32),
        grid=(B_pad // TB,),
        in_specs=[
            pl.BlockSpec((F, TB), lambda i: (0, i)),          # indices, batch on lanes
            pl.BlockSpec((R, VP), lambda i: (0, 0)),          # full weight table (VMEM)
            pl.BlockSpec(memory_space=pltpu.MemorySpace.SMEM) # bias scalar
        ],
        out_specs=pl.BlockSpec((1, TB), lambda i: (0, i)),
        compiler_params=pltpu.CompilerParams(
            dimension_semantics=("parallel",),
            vmem_limit_bytes=32 * 1024 * 1024),
    )(idx_t, w_comb, bias.astype(jnp.float32))

    return out[0, :B]                                          # matches torch .squeeze(1)


def _reference(x_idx, ffm_weights, fc_weight, bias, offsets, param_dtype=jnp.float32):
    """Pure-JAX reference of the PyTorch forward semantics.

    param_dtype lets us build a precision-matched reference (bf16-cast parameters,
    f32 math) for a tight comparison against the bf16-weight kernel.
    """
    idx = x_idx + offsets[None, :]
    F = ffm_weights.shape[0]
    ffm_w = ffm_weights.astype(param_dtype).astype(jnp.float32)
    fc_w = fc_weight.astype(param_dtype).astype(jnp.float32)
    xs = [ffm_w[i][idx] for i in range(F)]                            # each (B, F, D)
    ix = []
    for i in range(F - 1):
        for j in range(i + 1, F):
            ix.append(xs[j][:, i] * xs[i][:, j])
    ix = jnp.stack(ix, axis=1)                                        # (B, P, D)
    ffm_term = jnp.sum(jnp.sum(ix, axis=1), axis=1, keepdims=True)    # (B, 1)
    linear = jnp.sum(fc_w[idx], axis=1) + bias                        # (B, 1)
    return jax.nn.sigmoid((linear + ffm_term)[:, 0])                  # (B,)


if __name__ == "__main__":
    # Problem consistent with the module: field_dims=(10,20,30,40), embed_dim=8.
    field_dims = (10, 20, 30, 40)
    embed_dim = 8

    num_fields = len(field_dims)
    vocab = sum(field_dims)
    offsets = jnp.asarray(
        [0] + list(jnp.cumsum(jnp.asarray(field_dims))[:-1]), dtype=jnp.int32
    )

    key = jax.random.PRNGKey(0)
    k_x, k_ffm, k_fc = jax.random.split(key, 3)

    # Parameters (deterministic, in-script):
    #   FFM embeddings: num_fields tables of shape (vocab, embed_dim), xavier_uniform.
    xav = (6.0 / (vocab + embed_dim)) ** 0.5
    ffm_weights = jax.random.uniform(
        k_ffm, (num_fields, vocab, embed_dim), jnp.float32, -xav, xav
    )
    #   Linear embedding fc: (vocab, 1), torch default N(0, 1); bias: zeros.
    fc_weight = jax.random.normal(k_fc, (vocab, 1), jnp.float32)
    bias = jnp.zeros((1,), jnp.float32)

    # batch=2: single small tile (padded indices only); batch=640: 1024-lane tile.
    for batch in (2, 640):
        per_field = jnp.stack(
            [
                jax.random.randint(
                    jax.random.fold_in(k_x, f), (batch,), 0, field_dims[f]
                )
                for f in range(num_fields)
            ],
            axis=1,
        ).astype(jnp.int32)                                  # (B, F)

        out = jax.block_until_ready(
            ffm_forward(per_field, ffm_weights, fc_weight, bias, offsets)
        )
        assert out.shape == (batch,)

        # Precision-matched reference (bf16-cast params, f32 math): tight check --
        # the in-kernel one-hot MXU gather reproduces bf16 weights exactly.
        ref_bf16 = _reference(per_field, ffm_weights, fc_weight, bias, offsets,
                              param_dtype=jnp.bfloat16)
        assert jnp.allclose(out, ref_bf16, atol=1e-5, rtol=1e-5), (batch, out, ref_bf16)

        # Full-f32 reference: loose sanity check (bf16 parameter rounding only).
        ref_f32 = _reference(per_field, ffm_weights, fc_weight, bias, offsets)
        assert jnp.allclose(out, ref_f32, atol=2e-2, rtol=2e-2), (batch, out, ref_f32)

    print("KERNEL_OK")
</pallas_src>

<mosaic_0001>
module attributes {stable_mosaic.version = 11 : i64} {
  func.func @_ffm_kernel(%arg0: i32, %arg1: memref<4x512xi32, #tpu.memory_space<vmem>>, %arg2: memref<40x128xbf16, #tpu.memory_space<vmem>>, %arg3: memref<1xf32, #tpu.memory_space<smem>>, %arg4: memref<1x512xf32, #tpu.memory_space<vmem>>) attributes {dimension_semantics = [#tpu.dimension_semantics<parallel>], iteration_bounds = array<i64: 1>, scalar_prefetch = 0 : i64, scratch_operands = 0 : i64, tpu.core_type = #tpu.core_type<tc>, window_params = [{transform_indices = @transform_0, window_bounds = array<i64: 4, 512>}, {pipeline_mode = #tpu.pipeline_mode<synchronous>, transform_indices = @transform_1, window_bounds = array<i64: 40, 128>}, {transform_indices = @transform_2, window_bounds = array<i64: 1>}, {transform_indices = @transform_3, window_bounds = array<i64: 1, 512>}]} {
    %c0 = arith.constant 0 : index
    %c0_0 = arith.constant 0 : index
    %0 = vector.load %arg2[%c0, %c0_0] : memref<40x128xbf16, #tpu.memory_space<vmem>>, vector<40x128xbf16>
    %c0_1 = arith.constant 0 : index
    %c0_2 = arith.constant 0 : index
    %1 = vector.load %arg1[%c0_1, %c0_2] : memref<4x512xi32, #tpu.memory_space<vmem>>, vector<4x512xi32>
    %2 = tpu.iota {dimensions = array<i32: 0>} : vector<128x512xi32>
    %3 = vector.extract_strided_slice %1 {offsets = [0, 0], sizes = [1, 512], strides = [1, 1]} : vector<4x512xi32> to vector<1x512xi32>
    %4 = vector.shape_cast %3 : vector<1x512xi32> to vector<512xi32>
    %5 = vector.shape_cast %4 : vector<512xi32> to vector<1x512xi32>
    %6 = vector.broadcast %5 : vector<1x512xi32> to vector<128x512xi32>
    %7 = arith.cmpi eq, %2, %6 : vector<128x512xi32>
    %8 = arith.extui %7 : vector<128x512xi1> to vector<128x512xi32>
    %9 = arith.sitofp %8 : vector<128x512xi32> to vector<128x512xf32>
    %10 = arith.truncf %9 : vector<128x512xf32> to vector<128x512xbf16>
    %cst = arith.constant dense<0.000000e+00> : vector<40x512xf32>
    %11 = tpu.matmul %0, %10, %cst {dimension_numbers = #tpu.dot_dimension_numbers<[1], [0], [0], [1], [0, 0, 1, 1], [], []>} : vector<40x128xbf16>, vector<128x512xbf16>, vector<40x512xf32> -> vector<40x512xf32>
    %12 = vector.extract_strided_slice %1 {offsets = [1, 0], sizes = [1, 512], strides = [1, 1]} : vector<4x512xi32> to vector<1x512xi32>
    %13 = vector.shape_cast %12 : vector<1x512xi32> to vector<512xi32>
    %14 = vector.shape_cast %13 : vector<512xi32> to vector<1x512xi32>
    %15 = vector.broadcast %14 : vector<1x512xi32> to vector<128x512xi32>
    %16 = arith.cmpi eq, %2, %15 : vector<128x512xi32>
    %17 = arith.extui %16 : vector<128x512xi1> to vector<128x512xi32>
    %18 = arith.sitofp %17 : vector<128x512xi32> to vector<128x512xf32>
    %19 = arith.truncf %18 : vector<128x512xf32> to vector<128x512xbf16>
    %cst_3 = arith.constant dense<0.000000e+00> : vector<40x512xf32>
    %20 = tpu.matmul %0, %19, %cst_3 {dimension_numbers = #tpu.dot_dimension_numbers<[1], [0], [0], [1], [0, 0, 1, 1], [], []>} : vector<40x128xbf16>, vector<128x512xbf16>, vector<40x512xf32> -> vector<40x512xf32>
    %21 = vector.extract_strided_slice %1 {offsets = [2, 0], sizes = [1, 512], strides = [1, 1]} : vector<4x512xi32> to vector<1x512xi32>
    %22 = vector.shape_cast %21 : vector<1x512xi32> to vector<512xi32>
    %23 = vector.shape_cast %22 : vector<512xi32> to vector<1x512xi32>
    %24 = vector.broadcast %23 : vector<1x512xi32> to vector<128x512xi32>
    %25 = arith.cmpi eq, %2, %24 : vector<128x512xi32>
    %26 = arith.extui %25 : vector<128x512xi1> to vector<128x512xi32>
    %27 = arith.sitofp %26 : vector<128x512xi32> to vector<128x512xf32>
    %28 = arith.truncf %27 : vector<128x512xf32> to vector<128x512xbf16>
    %cst_4 = arith.constant dense<0.000000e+00> : vector<40x512xf32>
    %29 = tpu.matmul %0, %28, %cst_4 {dimension_numbers = #tpu.dot_dimension_numbers<[1], [0], [0], [1], [0, 0, 1, 1], [], []>} : vector<40x128xbf16>, vector<128x512xbf16>, vector<40x512xf32> -> vector<40x512xf32>
    %30 = vector.extract_strided_slice %1 {offsets = [3, 0], sizes = [1, 512], strides = [1, 1]} : vector<4x512xi32> to vector<1x512xi32>
    %31 = vector.shape_cast %30 : vector<1x512xi32> to vector<512xi32>
    %32 = vector.shape_cast %31 : vector<512xi32> to vector<1x512xi32>
    %33 = vector.broadcast %32 : vector<1x512xi32> to vector<128x512xi32>
    %34 = arith.cmpi eq, %2, %33 : vector<128x512xi32>
    %35 = arith.extui %34 : vector<128x512xi1> to vector<128x512xi32>
    %36 = arith.sitofp %35 : vector<128x512xi32> to vector<128x512xf32>
    %37 = arith.truncf %36 : vector<128x512xf32> to vector<128x512xbf16>
    %cst_5 = arith.constant dense<0.000000e+00> : vector<40x512xf32>
    %38 = tpu.matmul %0, %37, %cst_5 {dimension_numbers = #tpu.dot_dimension_numbers<[1], [0], [0], [1], [0, 0, 1, 1], [], []>} : vector<40x128xbf16>, vector<128x512xbf16>, vector<40x512xf32> -> vector<40x512xf32>
    %c0_6 = arith.constant 0 : index
    %39 = memref.load %arg3[%c0_6] : memref<1xf32, #tpu.memory_space<smem>>
    %40 = vector.extract_strided_slice %11 {offsets = [32, 0], sizes = [1, 512], strides = [1, 1]} : vector<40x512xf32> to vector<1x512xf32>
    %cst_7 = arith.constant 0.000000e+00 : f32
    %41 = vector.broadcast %cst_7 : f32 to vector<1x512xf32>
    %42 = arith.addf %41, %40 : vector<1x512xf32>
    %43 = vector.extract_strided_slice %20 {offsets = [32, 0], sizes = [1, 512], strides = [1, 1]} : vector<40x512xf32> to vector<1x512xf32>
    %44 = arith.addf %42, %43 : vector<1x512xf32>
    %45 = vector.extract_strided_slice %29 {offsets = [32, 0], sizes = [1, 512], strides = [1, 1]} : vector<40x512xf32> to vector<1x512xf32>
    %46 = arith.addf %44, %45 : vector<1x512xf32>
    %47 = vector.extract_strided_slice %38 {offsets = [32, 0], sizes = [1, 512], strides = [1, 1]} : vector<40x512xf32> to vector<1x512xf32>
    %48 = arith.addf %46, %47 : vector<1x512xf32>
    %49 = vector.broadcast %39 : f32 to vector<1x512xf32>
    %50 = arith.addf %49, %48 : vector<1x512xf32>
    %51 = vector.extract_strided_slice %11 {offsets = [8, 0], sizes = [8, 512], strides = [1, 1]} : vector<40x512xf32> to vector<8x512xf32>
    %52 = vector.extract_strided_slice %20 {offsets = [0, 0], sizes = [8, 512], strides = [1, 1]} : vector<40x512xf32> to vector<8x512xf32>
    %53 = arith.mulf %51, %52 : vector<8x512xf32>
    %cst_8 = arith.constant dense<0.000000e+00> : vector<512xf32>
    %54 = vector.multi_reduction <add>, %53, %cst_8 [0] : vector<8x512xf32> to vector<512xf32>
    %55 = vector.shape_cast %54 : vector<512xf32> to vector<1x512xf32>
    %56 = arith.addf %50, %55 : vector<1x512xf32>
    %57 = vector.extract_strided_slice %11 {offsets = [16, 0], sizes = [8, 512], strides = [1, 1]} : vector<40x512xf32> to vector<8x512xf32>
    %58 = vector.extract_strided_slice %29 {offsets = [0, 0], sizes = [8, 512], strides = [1, 1]} : vector<40x512xf32> to vector<8x512xf32>
    %59 = arith.mulf %57, %58 : vector<8x512xf32>
    %cst_9 = arith.constant dense<0.000000e+00> : vector<512xf32>
    %60 = vector.multi_reduction <add>, %59, %cst_9 [0] : vector<8x512xf32> to vector<512xf32>
    %61 = vector.shape_cast %60 : vector<512xf32> to vector<1x512xf32>
    %62 = arith.addf %56, %61 : vector<1x512xf32>
    %63 = vector.extract_strided_slice %11 {offsets = [24, 0], sizes = [8, 512], strides = [1, 1]} : vector<40x512xf32> to vector<8x512xf32>
    %64 = vector.extract_strided_slice %38 {offsets = [0, 0], sizes = [8, 512], strides = [1, 1]} : vector<40x512xf32> to vector<8x512xf32>
    %65 = arith.mulf %63, %64 : vector<8x512xf32>
    %cst_10 = arith.constant dense<0.000000e+00> : vector<512xf32>
    %66 = vector.multi_reduction <add>, %65, %cst_10 [0] : vector<8x512xf32> to vector<512xf32>
    %67 = vector.shape_cast %66 : vector<512xf32> to vector<1x512xf32>
    %68 = arith.addf %62, %67 : vector<1x512xf32>
    %69 = vector.extract_strided_slice %20 {offsets = [16, 0], sizes = [8, 512], strides = [1, 1]} : vector<40x512xf32> to vector<8x512xf32>
    %70 = vector.extract_strided_slice %29 {offsets = [8, 0], sizes = [8, 512], strides = [1, 1]} : vector<40x512xf32> to vector<8x512xf32>
    %71 = arith.mulf %69, %70 : vector<8x512xf32>
    %cst_11 = arith.constant dense<0.000000e+00> : vector<512xf32>
    %72 = vector.multi_reduction <add>, %71, %cst_11 [0] : vector<8x512xf32> to vector<512xf32>
    %73 = vector.shape_cast %72 : vector<512xf32> to vector<1x512xf32>
    %74 = arith.addf %68, %73 : vector<1x512xf32>
    %75 = vector.extract_strided_slice %20 {offsets = [24, 0], sizes = [8, 512], strides = [1, 1]} : vector<40x512xf32> to vector<8x512xf32>
    %76 = vector.extract_strided_slice %38 {offsets = [8, 0], sizes = [8, 512], strides = [1, 1]} : vector<40x512xf32> to vector<8x512xf32>
    %77 = arith.mulf %75, %76 : vector<8x512xf32>
    %cst_12 = arith.constant dense<0.000000e+00> : vector<512xf32>
    %78 = vector.multi_reduction <add>, %77, %cst_12 [0] : vector<8x512xf32> to vector<512xf32>
    %79 = vector.shape_cast %78 : vector<512xf32> to vector<1x512xf32>
    %80 = arith.addf %74, %79 : vector<1x512xf32>
    %81 = vector.extract_strided_slice %29 {offsets = [24, 0], sizes = [8, 512], strides = [1, 1]} : vector<40x512xf32> to vector<8x512xf32>
    %82 = vector.extract_strided_slice %38 {offsets = [16, 0], sizes = [8, 512], strides = [1, 1]} : vector<40x512xf32> to vector<8x512xf32>
    %83 = arith.mulf %81, %82 : vector<8x512xf32>
    %cst_13 = arith.constant dense<0.000000e+00> : vector<512xf32>
    %84 = vector.multi_reduction <add>, %83, %cst_13 [0] : vector<8x512xf32> to vector<512xf32>
    %85 = vector.shape_cast %84 : vector<512xf32> to vector<1x512xf32>
    %86 = arith.addf %80, %85 : vector<1x512xf32>
    %87 = arith.negf %86 : vector<1x512xf32>
    %88 = math.exp %87 : vector<1x512xf32>
    %cst_14 = arith.constant 1.000000e+00 : f32
    %89 = vector.broadcast %cst_14 : f32 to vector<1x512xf32>
    %90 = arith.addf %89, %88 : vector<1x512xf32>
    %91 = arith.divf %89, %90 : vector<1x512xf32>
    %c0_15 = arith.constant 0 : index
    %c0_16 = arith.constant 0 : index
    %92 = vector.load %arg4[%c0_15, %c0_16] : memref<1x512xf32, #tpu.memory_space<vmem>>, vector<1x512xf32>
    tpu.vector_store %arg4[%c0_15, %c0_16], %91 {strides = array<i32>} : memref<1x512xf32, #tpu.memory_space<vmem>>, vector<1x512xf32>,
    return
  }
  func.func @transform_0(%arg0: i32) -> (i32, i32) {
    %c0_i32 = arith.constant 0 : i32
    %c0_i32_0 = arith.constant 0 : i32
    return %c0_i32, %arg0 : i32, i32
  }
  func.func @transform_1(%arg0: i32) -> (i32, i32) {
    %c0_i32 = arith.constant 0 : i32
    %c0_i32_0 = arith.constant 0 : i32
    %c0_i32_1 = arith.constant 0 : i32
    return %c0_i32, %c0_i32_0 : i32, i32
  }
  func.func @transform_2(%arg0: i32) -> i32 {
    %c0_i32 = arith.constant 0 : i32
    %c0_i32_0 = arith.constant 0 : i32
    return %c0_i32 : i32
  }
  func.func @transform_3(%arg0: i32) -> (i32, i32) {
    %c0_i32 = arith.constant 0 : i32
    %c0_i32_0 = arith.constant 0 : i32
    return %c0_i32, %arg0 : i32, i32
  }
}

</mosaic_0001>

<llo_original>
// kernel: ffm_forward.1
$region0: #{ffm_forward.1}
  #allocation0 [shape = 'u32[]', space=smem, size = 0x4, offset = 0x4, fixed_abs, tag = 'smem constant byte address 0x4 - core index']
  #allocation1 [shape = 'u32[144,128]{1,0:T(1,128)}', space=vmem, size = 0x12000, scoped, tag = 'internal scratch']
  #allocation2 [shape = 'f32[1]{0:T(128)S(6)}', space=smem, size = 0x200, scoped, tag = 'scoped memory for ffm_forward.1']
  %s0 = inlined_call_operand.vmem [shape: s32[4,512], index: 0, kind: input, shape index: {}]
  %s1 = inlined_call_operand.vmem [shape: bf16[40,128], index: 1, kind: input, shape index: {}]
  %s2 = inlined_call_operand.<no memory space> [shape: f32[1], index: 2, kind: input, shape index: {}]
  %s3 = inlined_call_operand.vmem [shape: f32[1,512], index: 3, kind: output, shape index: {}]
  %s4 = sld [smem:[#allocation0]]
  $region22: #{ffm_forward.1} parent=0
    _
  %s6 = ssub.s32 1, %s4
  %s7 = scalar_select 0, %s6, %s4
  %8 = sst [smem:[#allocation2]] %s2
  // Predicated region
  $region2: #{ffm_forward.1} parent=0 // pred_check
    _
  $region3: #{ffm_forward.1} parent=0 // pred_check_branch
    %10 = sbr.rel (0) target = $region5
  $region4: #{ffm_forward.1} parent=0 // pred_region
    _
  $region5: #{ffm_forward.1} parent=0 // pred_fallthru
    _
  // Predicated region
  $region6: #{ffm_forward.1} parent=0 // pred_check
    _
  $region7: #{ffm_forward.1} parent=0 // pred_check_branch
    %12 = sbr.rel (0) target = $region9
  $region8: #{ffm_forward.1} parent=0 // pred_region
    _
  $region9: #{ffm_forward.1} parent=0 // pred_fallthru
    _
  // Predicated region
  $region10: #{ffm_forward.1} parent=0 // pred_check
    _
  $region11: #{ffm_forward.1} parent=0 // pred_check_branch
    %14 = sbr.rel (0) target = $region13
  $region12: #{ffm_forward.1} parent=0 // pred_region
    _
  $region13: #{ffm_forward.1} parent=0 // pred_fallthru
    _
  %v16 = vld [vmem:[%s1] sm:$0xf]
  %v17 = vld [vmem:[%s1 + $0x4] sm:$0xf]
  %v18 = vld [vmem:[%s1 + $0x8] sm:$0xf]
  %v19 = vld [vmem:[%s1 + $0xc] sm:$0xf]
  %v20 = vld [vmem:[%s1 + $0x10] sm:$0xf]
  %v21 = vld [vmem:[%s0] sm:$0xff]
  %v22 = vld [vmem:[%s0 + $0x8] sm:$0xff]
  %v23 = vlaneseq
  %v24 = vshrl.u32 %v23, 7
  %v25 = vadd.s32 %v24, 8
  %v26 = vadd.s32 %v24, 16
  %v27 = vadd.s32 %v24, 24
  %v28 = vadd.s32 %v24, 32
  %v29 = vadd.s32 %v24, 40
  %v30 = vadd.s32 %v24, 48
  %v31 = vadd.s32 %v24, 56
  %v32 = vadd.s32 %v24, 64
  %v33 = vadd.s32 %v24, 72
  %v34 = vadd.s32 %v24, 80
  %v35 = vadd.s32 %v24, 88
  %v36 = vadd.s32 %v24, 96
  %v37 = vadd.s32 %v24, 104
  %v38 = vadd.s32 %v24, 112
  %v39 = vadd.s32 %v24, 120
  %v40 = vlaneseq
  %v41 = vshrl.u32 %v40, 7
  %v42 = vsub.s32 0, %v41
  %v43 = vrot.slane %v21, %v42
  %v44 = vlaneseq
  %v45 = vshrl.u32 %v44, 7
  %v46 = vsub.s32 4, %v45
  %v47 = vrot.slane %v21, %v46
  %v48 = vlaneseq
  %v49 = vshrl.u32 %v48, 7
  %v50 = vsub.s32 0, %v49
  %v51 = vrot.slane %v22, %v50
  %v52 = vlaneseq
  %v53 = vshrl.u32 %v52, 7
  %v54 = vsub.s32 4, %v53
  %v55 = vrot.slane %v22, %v54
  %v56 = vlaneseq
  %v57 = vshrl.u32 %v56, 7
  %v58 = vsub.s32 0, %v57
  %v59 = vrot.slane %v43, %v58
  %v60 = vlaneseq
  %v61 = vshrl.u32 %v60, 7
  %v62 = vsub.s32 0, %v61
  %v63 = vrot.slane %v47, %v62
  %v64 = vlaneseq
  %v65 = vshrl.u32 %v64, 7
  %v66 = vsub.s32 0, %v65
  %v67 = vrot.slane %v51, %v66
  %v68 = vlaneseq
  %v69 = vshrl.u32 %v68, 7
  %v70 = vsub.s32 0, %v69
  %v71 = vrot.slane %v55, %v70
  %vm72 = vcmp.eq.s32.totalorder %v24, %v59
  %vm73 = vcmp.eq.s32.totalorder %v24, %v63
  %vm74 = vcmp.eq.s32.totalorder %v24, %v67
  %vm75 = vcmp.eq.s32.totalorder %v24, %v71
  %vm76 = vcmp.eq.s32.totalorder %v25, %v59
  %vm77 = vcmp.eq.s32.totalorder %v25, %v63
  %vm78 = vcmp.eq.s32.totalorder %v25, %v67
  %vm79 = vcmp.eq.s32.totalorder %v25, %v71
  %vm80 = vcmp.eq.s32.totalorder %v26, %v59
  %vm81 = vcmp.eq.s32.totalorder %v26, %v63
  %vm82 = vcmp.eq.s32.totalorder %v26, %v67
  %vm83 = vcmp.eq.s32.totalorder %v26, %v71
  %vm84 = vcmp.eq.s32.totalorder %v27, %v59
  %vm85 = vcmp.eq.s32.totalorder %v27, %v63
  %vm86 = vcmp.eq.s32.totalorder %v27, %v67
  %vm87 = vcmp.eq.s32.totalorder %v27, %v71
  %vm88 = vcmp.eq.s32.totalorder %v28, %v59
  %vm89 = vcmp.eq.s32.totalorder %v28, %v63
  %vm90 = vcmp.eq.s32.totalorder %v28, %v67
  %vm91 = vcmp.eq.s32.totalorder %v28, %v71
  %vm92 = vcmp.eq.s32.totalorder %v29, %v59
  %vm93 = vcmp.eq.s32.totalorder %v29, %v63
  %vm94 = vcmp.eq.s32.totalorder %v29, %v67
  %vm95 = vcmp.eq.s32.totalorder %v29, %v71
  %vm96 = vcmp.eq.s32.totalorder %v30, %v59
  %vm97 = vcmp.eq.s32.totalorder %v30, %v63
  %vm98 = vcmp.eq.s32.totalorder %v30, %v67
  %vm99 = vcmp.eq.s32.totalorder %v30, %v71
  %vm100 = vcmp.eq.s32.totalorder %v31, %v59
  %vm101 = vcmp.eq.s32.totalorder %v31, %v63
  %vm102 = vcmp.eq.s32.totalorder %v31, %v67
  %vm103 = vcmp.eq.s32.totalorder %v31, %v71
  %vm104 = vcmp.eq.s32.totalorder %v32, %v59
  %vm105 = vcmp.eq.s32.totalorder %v32, %v63
  %vm106 = vcmp.eq.s32.totalorder %v32, %v67
  %vm107 = vcmp.eq.s32.totalorder %v32, %v71
  %vm108 = vcmp.eq.s32.totalorder %v33, %v59
  %vm109 = vcmp.eq.s32.totalorder %v33, %v63
  %vm110 = vcmp.eq.s32.totalorder %v33, %v67
  %vm111 = vcmp.eq.s32.totalorder %v33, %v71
  %vm112 = vcmp.eq.s32.totalorder %v34, %v59
  %vm113 = vcmp.eq.s32.totalorder %v34, %v63
  %vm114 = vcmp.eq.s32.totalorder %v34, %v67
  %vm115 = vcmp.eq.s32.totalorder %v34, %v71
  %vm116 = vcmp.eq.s32.totalorder %v35, %v59
  %vm117 = vcmp.eq.s32.totalorder %v35, %v63
  %vm118 = vcmp.eq.s32.totalorder %v35, %v67
  %vm119 = vcmp.eq.s32.totalorder %v35, %v71
  %vm120 = vcmp.eq.s32.totalorder %v36, %v59
  %vm121 = vcmp.eq.s32.totalorder %v36, %v63
  %vm122 = vcmp.eq.s32.totalorder %v36, %v67
  %vm123 = vcmp.eq.s32.totalorder %v36, %v71
  %vm124 = vcmp.eq.s32.totalorder %v37, %v59
  %vm125 = vcmp.eq.s32.totalorder %v37, %v63
  %vm126 = vcmp.eq.s32.totalorder %v37, %v67
  %vm127 = vcmp.eq.s32.totalorder %v37, %v71
  %vm128 = vcmp.eq.s32.totalorder %v38, %v59
  %vm129 = vcmp.eq.s32.totalorder %v38, %v63
  %vm130 = vcmp.eq.s32.totalorder %v38, %v67
  %vm131 = vcmp.eq.s32.totalorder %v38, %v71
  %vm132 = vcmp.eq.s32.totalorder %v39, %v59
  %vm133 = vcmp.eq.s32.totalorder %v39, %v63
  %vm134 = vcmp.eq.s32.totalorder %v39, %v67
  %vm135 = vcmp.eq.s32.totalorder %v39, %v71
  %v136 = vsel %vm72, 1, 0
  %v137 = vsel %vm73, 1, 0
  %v138 = vsel %vm74, 1, 0
  %v139 = vsel %vm75, 1, 0
  %v140 = vsel %vm76, 1, 0
  %v141 = vsel %vm77, 1, 0
  %v142 = vsel %vm78, 1, 0
  %v143 = vsel %vm79, 1, 0
  %v144 = vsel %vm80, 1, 0
  %v145 = vsel %vm81, 1, 0
  %v146 = vsel %vm82, 1, 0
  %v147 = vsel %vm83, 1, 0
  %v148 = vsel %vm84, 1, 0
  %v149 = vsel %vm85, 1, 0
  %v150 = vsel %vm86, 1, 0
  %v151 = vsel %vm87, 1, 0
  %v152 = vsel %vm88, 1, 0
  %v153 = vsel %vm89, 1, 0
  %v154 = vsel %vm90, 1, 0
  %v155 = vsel %vm91, 1, 0
  %v156 = vsel %vm92, 1, 0
  %v157 = vsel %vm93, 1, 0
  %v158 = vsel %vm94, 1, 0
  %v159 = vsel %vm95, 1, 0
  %v160 = vsel %vm96, 1, 0
  %v161 = vsel %vm97, 1, 0
  %v162 = vsel %vm98, 1, 0
  %v163 = vsel %vm99, 1, 0
  %v164 = vsel %vm100, 1, 0
  %v165 = vsel %vm101, 1, 0
  %v166 = vsel %vm102, 1, 0
  %v167 = vsel %vm103, 1, 0
  %v168 = vsel %vm104, 1, 0
  %v169 = vsel %vm105, 1, 0
  %v170 = vsel %vm106, 1, 0
  %v171 = vsel %vm107, 1, 0
  %v172 = vsel %vm108, 1, 0
  %v173 = vsel %vm109, 1, 0
  %v174 = vsel %vm110, 1, 0
  %v175 = vsel %vm111, 1, 0
  %v176 = vsel %vm112, 1, 0
  %v177 = vsel %vm113, 1, 0
  %v178 = vsel %vm114, 1, 0
  %v179 = vsel %vm115, 1, 0
  %v180 = vsel %vm116, 1, 0
  %v181 = vsel %vm117, 1, 0
  %v182 = vsel %vm118, 1, 0
  %v183 = vsel %vm119, 1, 0
  %v184 = vsel %vm120, 1, 0
  %v185 = vsel %vm121, 1, 0
  %v186 = vsel %vm122, 1, 0
  %v187 = vsel %vm123, 1, 0
  %v188 = vsel %vm124, 1, 0
  %v189 = vsel %vm125, 1, 0
  %v190 = vsel %vm126, 1, 0
  %v191 = vsel %vm127, 1, 0
  %v192 = vsel %vm128, 1, 0
  %v193 = vsel %vm129, 1, 0
  %v194 = vsel %vm130, 1, 0
  %v195 = vsel %vm131, 1, 0
  %v196 = vsel %vm132, 1, 0
  %v197 = vsel %vm133, 1, 0
  %v198 = vsel %vm134, 1, 0
  %v199 = vsel %vm135, 1, 0
  %v200 = vcvt.s32.f32 %v136
  %v201 = vcvt.s32.f32 %v137
  %v202 = vcvt.s32.f32 %v138
  %v203 = vcvt.s32.f32 %v139
  %v204 = vcvt.s32.f32 %v140
  %v205 = vcvt.s32.f32 %v141
  %v206 = vcvt.s32.f32 %v142
  %v207 = vcvt.s32.f32 %v143
  %v208 = vcvt.s32.f32 %v144
  %v209 = vcvt.s32.f32 %v145
  %v210 = vcvt.s32.f32 %v146
  %v211 = vcvt.s32.f32 %v147
  %v212 = vcvt.s32.f32 %v148
  %v213 = vcvt.s32.f32 %v149
  %v214 = vcvt.s32.f32 %v150
  %v215 = vcvt.s32.f32 %v151
  %v216 = vcvt.s32.f32 %v152
  %v217 = vcvt.s32.f32 %v153
  %v218 = vcvt.s32.f32 %v154
  %v219 = vcvt.s32.f32 %v155
  %v220 = vcvt.s32.f32 %v156
  %v221 = vcvt.s32.f32 %v157
  %v222 = vcvt.s32.f32 %v158
  %v223 = vcvt.s32.f32 %v159
  %v224 = vcvt.s32.f32 %v160
  %v225 = vcvt.s32.f32 %v161
  %v226 = vcvt.s32.f32 %v162
  %v227 = vcvt.s32.f32 %v163
  %v228 = vcvt.s32.f32 %v164
  %v229 = vcvt.s32.f32 %v165
  %v230 = vcvt.s32.f32 %v166
  %v231 = vcvt.s32.f32 %v167
  %v232 = vcvt.s32.f32 %v168
  %v233 = vcvt.s32.f32 %v169
  %v234 = vcvt.s32.f32 %v170
  %v235 = vcvt.s32.f32 %v171
  %v236 = vcvt.s32.f32 %v172
  %v237 = vcvt.s32.f32 %v173
  %v238 = vcvt.s32.f32 %v174
  %v239 = vcvt.s32.f32 %v175
  %v240 = vcvt.s32.f32 %v176
  %v241 = vcvt.s32.f32 %v177
  %v242 = vcvt.s32.f32 %v178
  %v243 = vcvt.s32.f32 %v179
  %v244 = vcvt.s32.f32 %v180
  %v245 = vcvt.s32.f32 %v181
  %v246 = vcvt.s32.f32 %v182
  %v247 = vcvt.s32.f32 %v183
  %v248 = vcvt.s32.f32 %v184
  %v249 = vcvt.s32.f32 %v185
  %v250 = vcvt.s32.f32 %v186
  %v251 = vcvt.s32.f32 %v187
  %v252 = vcvt.s32.f32 %v188
  %v253 = vcvt.s32.f32 %v189
  %v254 = vcvt.s32.f32 %v190
  %v255 = vcvt.s32.f32 %v191
  %v256 = vcvt.s32.f32 %v192
  %v257 = vcvt.s32.f32 %v193
  %v258 = vcvt.s32.f32 %v194
  %v259 = vcvt.s32.f32 %v195
  %v260 = vcvt.s32.f32 %v196
  %v261 = vcvt.s32.f32 %v197
  %v262 = vcvt.s32.f32 %v198
  %v263 = vcvt.s32.f32 %v199
  %v264 = vpack.c.bf16 %v204, %v200
  %v265 = vpack.c.bf16 %v205, %v201
  %v266 = vpack.c.bf16 %v206, %v202
  %v267 = vpack.c.bf16 %v207, %v203
  %v268 = vpack.c.bf16 %v212, %v208
  %v269 = vpack.c.bf16 %v213, %v209
  %v270 = vpack.c.bf16 %v214, %v210
  %v271 = vpack.c.bf16 %v215, %v211
  %v272 = vpack.c.bf16 %v220, %v216
  %v273 = vpack.c.bf16 %v221, %v217
  %v274 = vpack.c.bf16 %v222, %v218
  %v275 = vpack.c.bf16 %v223, %v219
  %v276 = vpack.c.bf16 %v228, %v224
  %v277 = vpack.c.bf16 %v229, %v225
  %v278 = vpack.c.bf16 %v230, %v226
  %v279 = vpack.c.bf16 %v231, %v227
  %v280 = vpack.c.bf16 %v236, %v232
  %v281 = vpack.c.bf16 %v237, %v233
  %v282 = vpack.c.bf16 %v238, %v234
  %v283 = vpack.c.bf16 %v239, %v235
  %v284 = vpack.c.bf16 %v244, %v240
  %v285 = vpack.c.bf16 %v245, %v241
  %v286 = vpack.c.bf16 %v246, %v242
  %v287 = vpack.c.bf16 %v247, %v243
  %v288 = vpack.c.bf16 %v252, %v248
  %v289 = vpack.c.bf16 %v253, %v249
  %v290 = vpack.c.bf16 %v254, %v250
  %v291 = vpack.c.bf16 %v255, %v251
  %v292 = vpack.c.bf16 %v260, %v256
  %v293 = vpack.c.bf16 %v261, %v257
  %v294 = vpack.c.bf16 %v262, %v258
  %v295 = vpack.c.bf16 %v263, %v259
  %v301 = vunpack.c.l.b16 %v16
  %v302 = vunpack.c.l.b16 %v17
  %v303 = vunpack.c.l.b16 %v18
  %v304 = vunpack.c.l.b16 %v19
  %v305 = vunpack.c.l.b16 %v20
  %v306 = vpack.c.b16 %v302, %v301
  %v307 = vpack.c.b16 %v304, %v303
  %v308 = vpack.c.b16 %v305, %v305
  %312 = vmatprep.subr.bf16.mxu0 %v265
  %313 = vmatpush1.bf16.msra.mxu0 %v264
  %314 = vmatprep.subr.bf16.mxu0 %v269
  %315 = vmatpush1.bf16.msra.mxu0 %v268
  %316 = vmatprep.subr.bf16.mxu0 %v273
  %317 = vmatpush1.bf16.msra.mxu0 %v272
  %318 = vmatprep.subr.bf16.mxu0 %v277
  %319 = vmatpush1.bf16.msra.mxu0 %v276
  %320 = vmatprep.subr.bf16.mxu0 %v281
  %321 = vmatpush1.bf16.msra.mxu0 %v280
  %322 = vmatprep.subr.bf16.mxu0 %v285
  %323 = vmatpush1.bf16.msra.mxu0 %v284
  %324 = vmatprep.subr.bf16.mxu0 %v289
  %325 = vmatpush1.bf16.msra.mxu0 %v288
  %326 = vmatprep.subr.bf16.mxu0 %v293
  %327 = vmatpush1.bf16.msra.mxu0 %v292
  %328 = vmatprep.subr.bf16.mxu0 0
  %329 = vmatpush1.bf16.msra.mxu0 0
  %330 = vmatprep.subr.bf16.mxu0 0
  %331 = vmatpush1.bf16.msra.mxu0 0
  %332 = vmatprep.subr.bf16.mxu0 0
  %333 = vmatpush1.bf16.msra.mxu0 0
  %334 = vmatprep.subr.bf16.mxu0 0
  %335 = vmatpush1.bf16.msra.mxu0 0
  %336 = vmatprep.subr.bf16.mxu0 0
  %337 = vmatpush1.bf16.msra.mxu0 0
  %338 = vmatprep.subr.bf16.mxu0 0
  %339 = vmatpush1.bf16.msra.mxu0 0
  %340 = vmatprep.subr.bf16.mxu0 0
  %341 = vmatpush1.bf16.msra.mxu0 0
  %342 = vmatprep.subr.bf16.mxu0 0
  %343 = vmatpush1.bf16.msra.mxu0 0
  %344 = vmatprep.mubr.bf16.mxu0 0
  %345 = vmatmul.mubr.bf16.gmra.mrb[0].mxu0 %v306
  %v346 = vpop.f32.mrb[0].mxu0
  %v347 = vpop.f32.mrb[0].mxu0
  %v348 = vpop.f32.mrb[0].mxu0
  %v349 = vadd.f32 0.0, %v348
  %v350 = vpop.f32.mrb[0].mxu0
  %v351 = vadd.f32 0.0, %v350
  %352 = vmatprep.mubr.bf16.mxu0 0
  %353 = vmatmul.mubr.bf16.gmra.mrb[0].mxu0 %v307
  %v354 = vpop.f32.mrb[0].mxu0
  %v355 = vadd.f32 0.0, %v354
  %v356 = vpop.f32.mrb[0].mxu0
  %v357 = vadd.f32 0.0, %v356
  %v358 = vpop.f32.mrb[0].mxu0
  %v359 = vadd.f32 0.0, %v358
  %v360 = vpop.f32.mrb[0].mxu0
  %v361 = vadd.f32 0.0, %v360
  %362 = vmatprep.mubr.bf16.mxu0 0
  %363 = vmatmul.mubr.bf16.gmra.mrb[0].mxu0 %v308
  %v364 = vpop.f32.mrb[0].mxu0
  %v365 = vadd.f32 0.0, %v364
  %v366 = vpop.f32.mrb[0].mxu0
  %v367 = vadd.f32 0.0, %v366
  %v368 = vpop.f32.mrb[0].mxu0
  %v369 = vpop.f32.mrb[0].mxu0
  %370 = vdwg.mxu0
  %371 = vmatprep.subr.bf16.mxu0 %v267
  %372 = vmatpush1.bf16.msra.mxu0 %v266
  %373 = vmatprep.subr.bf16.mxu0 %v271
  %374 = vmatpush1.bf16.msra.mxu0 %v270
  %375 = vmatprep.subr.bf16.mxu0 %v275
  %376 = vmatpush1.bf16.msra.mxu0 %v274
  %377 = vmatprep.subr.bf16.mxu0 %v279
  %378 = vmatpush1.bf16.msra.mxu0 %v278
  %379 = vmatprep.subr.bf16.mxu0 %v283
  %380 = vmatpush1.bf16.msra.mxu0 %v282
  %381 = vmatprep.subr.bf16.mxu0 %v287
  %382 = vmatpush1.bf16.msra.mxu0 %v286
  %383 = vmatprep.subr.bf16.mxu0 %v291
  %384 = vmatpush1.bf16.msra.mxu0 %v290
  %385 = vmatprep.subr.bf16.mxu0 %v295
  %386 = vmatpush1.bf16.msra.mxu0 %v294
  %387 = vmatprep.subr.bf16.mxu0 0
  %388 = vmatpush1.bf16.msra.mxu0 0
  %389 = vmatprep.subr.bf16.mxu0 0
  %390 = vmatpush1.bf16.msra.mxu0 0
  %391 = vmatprep.subr.bf16.mxu0 0
  %392 = vmatpush1.bf16.msra.mxu0 0
  %393 = vmatprep.subr.bf16.mxu0 0
  %394 = vmatpush1.bf16.msra.mxu0 0
  %395 = vmatprep.subr.bf16.mxu0 0
  %396 = vmatpush1.bf16.msra.mxu0 0
  %397 = vmatprep.subr.bf16.mxu0 0
  %398 = vmatpush1.bf16.msra.mxu0 0
  %399 = vmatprep.subr.bf16.mxu0 0
  %400 = vmatpush1.bf16.msra.mxu0 0
  %401 = vmatprep.subr.bf16.mxu0 0
  %402 = vmatpush1.bf16.msra.mxu0 0
  %403 = vmatprep.mubr.bf16.mxu0 0
  %404 = vmatmul.mubr.bf16.gmra.mrb[0].mxu0 %v306
  %v405 = vpop.f32.mrb[0].mxu0
  %v406 = vpop.f32.mrb[0].mxu0
  %v407 = vpop.f32.mrb[0].mxu0
  %v408 = vadd.f32 0.0, %v407
  %v409 = vpop.f32.mrb[0].mxu0
  %v410 = vadd.f32 0.0, %v409
  %411 = vmatprep.mubr.bf16.mxu0 0
  %412 = vmatmul.mubr.bf16.gmra.mrb[0].mxu0 %v307
  %v413 = vpop.f32.mrb[0].mxu0
  %v414 = vadd.f32 0.0, %v413
  %v415 = vpop.f32.mrb[0].mxu0
  %v416 = vadd.f32 0.0, %v415
  %v417 = vpop.f32.mrb[0].mxu0
  %v418 = vadd.f32 0.0, %v417
  %v419 = vpop.f32.mrb[0].mxu0
  %v420 = vadd.f32 0.0, %v419
  %421 = vmatprep.mubr.bf16.mxu0 0
  %422 = vmatmul.mubr.bf16.gmra.mrb[0].mxu0 %v308
  %v423 = vpop.f32.mrb[0].mxu0
  %v424 = vadd.f32 0.0, %v423
  %v425 = vpop.f32.mrb[0].mxu0
  %v426 = vadd.f32 0.0, %v425
  %v427 = vpop.f32.mrb[0].mxu0
  %v428 = vpop.f32.mrb[0].mxu0
  %429 = vdwg.mxu0
  %v430 = vlaneseq
  %v431 = vshrl.u32 %v430, 7
  %v432 = vsub.s32 1, %v431
  %v433 = vrot.slane %v21, %v432
  %v434 = vlaneseq
  %v435 = vshrl.u32 %v434, 7
  %v436 = vsub.s32 5, %v435
  %v437 = vrot.slane %v21, %v436
  %v438 = vlaneseq
  %v439 = vshrl.u32 %v438, 7
  %v440 = vsub.s32 1, %v439
  %v441 = vrot.slane %v22, %v440
  %v442 = vlaneseq
  %v443 = vshrl.u32 %v442, 7
  %v444 = vsub.s32 5, %v443
  %v445 = vrot.slane %v22, %v444
  %v446 = vlaneseq
  %v447 = vshrl.u32 %v446, 7
  %v448 = vsub.s32 1, %v447
  %v449 = vrot.slane %v433, %v448
  %v450 = vlaneseq
  %v451 = vshrl.u32 %v450, 7
  %v452 = vsub.s32 1, %v451
  %v453 = vrot.slane %v437, %v452
  %v454 = vlaneseq
  %v455 = vshrl.u32 %v454, 7
  %v456 = vsub.s32 1, %v455
  %v457 = vrot.slane %v441, %v456
  %v458 = vlaneseq
  %v459 = vshrl.u32 %v458, 7
  %v460 = vsub.s32 1, %v459
  %v461 = vrot.slane %v445, %v460
  %vm462 = vcmp.eq.s32.totalorder %v24, %v449
  %vm463 = vcmp.eq.s32.totalorder %v24, %v453
  %vm464 = vcmp.eq.s32.totalorder %v24, %v457
  %vm465 = vcmp.eq.s32.totalorder %v24, %v461
  %vm466 = vcmp.eq.s32.totalorder %v25, %v449
  %vm467 = vcmp.eq.s32.totalorder %v25, %v453
  %vm468 = vcmp.eq.s32.totalorder %v25, %v457
  %vm469 = vcmp.eq.s32.totalorder %v25, %v461
  %vm470 = vcmp.eq.s32.totalorder %v26, %v449
  %vm471 = vcmp.eq.s32.totalorder %v26, %v453
  %vm472 = vcmp.eq.s32.totalorder %v26, %v457
  %vm473 = vcmp.eq.s32.totalorder %v26, %v461
  %vm474 = vcmp.eq.s32.totalorder %v27, %v449
  %vm475 = vcmp.eq.s32.totalorder %v27, %v453
  %vm476 = vcmp.eq.s32.totalorder %v27, %v457
  %vm477 = vcmp.eq.s32.totalorder %v27, %v461
  %vm478 = vcmp.eq.s32.totalorder %v28, %v449
  %vm479 = vcmp.eq.s32.totalorder %v28, %v453
  %vm480 = vcmp.eq.s32.totalorder %v28, %v457
  %vm481 = vcmp.eq.s32.totalorder %v28, %v461
  %vm482 = vcmp.eq.s32.totalorder %v29, %v449
  %vm483 = vcmp.eq.s32.totalorder %v29, %v453
  %vm484 = vcmp.eq.s32.totalorder %v29, %v457
  %vm485 = vcmp.eq.s32.totalorder %v29, %v461
  %vm486 = vcmp.eq.s32.totalorder %v30, %v449
  %vm487 = vcmp.eq.s32.totalorder %v30, %v453
  %vm488 = vcmp.eq.s32.totalorder %v30, %v457
  %vm489 = vcmp.eq.s32.totalorder %v30, %v461
  %vm490 = vcmp.eq.s32.totalorder %v31, %v449
  %vm491 = vcmp.eq.s32.totalorder %v31, %v453
  %vm492 = vcmp.eq.s32.totalorder %v31, %v457
  %vm493 = vcmp.eq.s32.totalorder %v31, %v461
  %vm494 = vcmp.eq.s32.totalorder %v32, %v449
  %vm495 = vcmp.eq.s32.totalorder %v32, %v453
  %vm496 = vcmp.eq.s32.totalorder %v32, %v457
  %vm497 = vcmp.eq.s32.totalorder %v32, %v461
  %vm498 = vcmp.eq.s32.totalorder %v33, %v449
  %vm499 = vcmp.eq.s32.totalorder %v33, %v453
  %vm500 = vcmp.eq.s32.totalorder %v33, %v457
  %vm501 = vcmp.eq.s32.totalorder %v33, %v461
  %vm502 = vcmp.eq.s32.totalorder %v34, %v449
  %vm503 = vcmp.eq.s32.totalorder %v34, %v453
  %vm504 = vcmp.eq.s32.totalorder %v34, %v457
  %vm505 = vcmp.eq.s32.totalorder %v34, %v461
  %vm506 = vcmp.eq.s32.totalorder %v35, %v449
  %vm507 = vcmp.eq.s32.totalorder %v35, %v453
  %vm508 = vcmp.eq.s32.totalorder %v35, %v457
  %vm509 = vcmp.eq.s32.totalorder %v35, %v461
  %vm510 = vcmp.eq.s32.totalorder %v36, %v449
  %vm511 = vcmp.eq.s32.totalorder %v36, %v453
  %vm512 = vcmp.eq.s32.totalorder %v36, %v457
  %vm513 = vcmp.eq.s32.totalorder %v36, %v461
  %vm514 = vcmp.eq.s32.totalorder %v37, %v449
  %vm515 = vcmp.eq.s32.totalorder %v37, %v453
  %vm516 = vcmp.eq.s32.totalorder %v37, %v457
  %vm517 = vcmp.eq.s32.totalorder %v37, %v461
  %vm518 = vcmp.eq.s32.totalorder %v38, %v449
  %vm519 = vcmp.eq.s32.totalorder %v38, %v453
  %vm520 = vcmp.eq.s32.totalorder %v38, %v457
  %vm521 = vcmp.eq.s32.totalorder %v38, %v461
  %vm522 = vcmp.eq.s32.totalorder %v39, %v449
  %vm523 = vcmp.eq.s32.totalorder %v39, %v453
  %vm524 = vcmp.eq.s32.totalorder %v39, %v457
  %vm525 = vcmp.eq.s32.totalorder %v39, %v461
  %v526 = vsel %vm462, 1, 0
  %v527 = vsel %vm463, 1, 0
  %v528 = vsel %vm464, 1, 0
  %v529 = vsel %vm465, 1, 0
  %v530 = vsel %vm466, 1, 0
  %v531 = vsel %vm467, 1, 0
  %v532 = vsel %vm468, 1, 0
  %v533 = vsel %vm469, 1, 0
  %v534 = vsel %vm470, 1, 0
  %v535 = vsel %vm471, 1, 0
  %v536 = vsel %vm472, 1, 0
  %v537 = vsel %vm473, 1, 0
  %v538 = vsel %vm474, 1, 0
  %v539 = vsel %vm475, 1, 0
  %v540 = vsel %vm476, 1, 0
  %v541 = vsel %vm477, 1, 0
  %v542 = vsel %vm478, 1, 0
  %v543 = vsel %vm479, 1, 0
  %v544 = vsel %vm480, 1, 0
  %v545 = vsel %vm481, 1, 0
  %v546 = vsel %vm482, 1, 0
  %v547 = vsel %vm483, 1, 0
  %v548 = vsel %vm484, 1, 0
  %v549 = vsel %vm485, 1, 0
  %v550 = vsel %vm486, 1, 0
  %v551 = vsel %vm487, 1, 0
  %v552 = vsel %vm488, 1, 0
  %v553 = vsel %vm489, 1, 0
  %v554 = vsel %vm490, 1, 0
  %v555 = vsel %vm491, 1, 0
  %v556 = vsel %vm492, 1, 0
  %v557 = vsel %vm493, 1, 0
  %v558 = vsel %vm494, 1, 0
  %v559 = vsel %vm495, 1, 0
  %v560 = vsel %vm496, 1, 0
  %v561 = vsel %vm497, 1, 0
  %v562 = vsel %vm498, 1, 0
  %v563 = vsel %vm499, 1, 0
  %v564 = vsel %vm500, 1, 0
  %v565 = vsel %vm501, 1, 0
  %v566 = vsel %vm502, 1, 0
  %v567 = vsel %vm503, 1, 0
  %v568 = vsel %vm504, 1, 0
  %v569 = vsel %vm505, 1, 0
  %v570 = vsel %vm506, 1, 0
  %v571 = vsel %vm507, 1, 0
  %v572 = vsel %vm508, 1, 0
  %v573 = vsel %vm509, 1, 0
  %v574 = vsel %vm510, 1, 0
  %v575 = vsel %vm511, 1, 0
  %v576 = vsel %vm512, 1, 0
  %v577 = vsel %vm513, 1, 0
  %v578 = vsel %vm514, 1, 0
  %v579 = vsel %vm515, 1, 0
  %v580 = vsel %vm516, 1, 0
  %v581 = vsel %vm517, 1, 0
  %v582 = vsel %vm518, 1, 0
  %v583 = vsel %vm519, 1, 0
  %v584 = vsel %vm520, 1, 0
  %v585 = vsel %vm521, 1, 0
  %v586 = vsel %vm522, 1, 0
  %v587 = vsel %vm523, 1, 0
  %v588 = vsel %vm524, 1, 0
  %v589 = vsel %vm525, 1, 0
  %v590 = vcvt.s32.f32 %v526
  %v591 = vcvt.s32.f32 %v527
  %v592 = vcvt.s32.f32 %v528
  %v593 = vcvt.s32.f32 %v529
  %v594 = vcvt.s32.f32 %v530
  %v595 = vcvt.s32.f32 %v531
  %v596 = vcvt.s32.f32 %v532
  %v597 = vcvt.s32.f32 %v533
  %v598 = vcvt.s32.f32 %v534
  %v599 = vcvt.s32.f32 %v535
  %v600 = vcvt.s32.f32 %v536
  %v601 = vcvt.s32.f32 %v537
  %v602 = vcvt.s32.f32 %v538
  %v603 = vcvt.s32.f32 %v539
  %v604 = vcvt.s32.f32 %v540
  %v605 = vcvt.s32.f32 %v541
  %v606 = vcvt.s32.f32 %v542
  %v607 = vcvt.s32.f32 %v543
  %v608 = vcvt.s32.f32 %v544
  %v609 = vcvt.s32.f32 %v545
  %v610 = vcvt.s32.f32 %v546
  %v611 = vcvt.s32.f32 %v547
  %v612 = vcvt.s32.f32 %v548
  %v613 = vcvt.s32.f32 %v549
  %v614 = vcvt.s32.f32 %v550
  %v615 = vcvt.s32.f32 %v551
  %v616 = vcvt.s32.f32 %v552
  %v617 = vcvt.s32.f32 %v553
  %v618 = vcvt.s32.f32 %v554
  %v619 = vcvt.s32.f32 %v555
  %v620 = vcvt.s32.f32 %v556
  %v621 = vcvt.s32.f32 %v557
  %v622 = vcvt.s32.f32 %v558
  %v623 = vcvt.s32.f32 %v559
  %v624 = vcvt.s32.f32 %v560
  %v625 = vcvt.s32.f32 %v561
  %v626 = vcvt.s32.f32 %v562
  %v627 = vcvt.s32.f32 %v563
  %v628 = vcvt.s32.f32 %v564
  %v629 = vcvt.s32.f32 %v565
  %v630 = vcvt.s32.f32 %v566
  %v631 = vcvt.s32.f32 %v567
  %v632 = vcvt.s32.f32 %v568
  %v633 = vcvt.s32.f32 %v569
  %v634 = vcvt.s32.f32 %v570
  %v635 = vcvt.s32.f32 %v571
  %v636 = vcvt.s32.f32 %v572
  %v637 = vcvt.s32.f32 %v573
  %v638 = vcvt.s32.f32 %v574
  %v639 = vcvt.s32.f32 %v575
  %v640 = vcvt.s32.f32 %v576
  %v641 = vcvt.s32.f32 %v577
  %v642 = vcvt.s32.f32 %v578
  %v643 = vcvt.s32.f32 %v579
  %v644 = vcvt.s32.f32 %v580
  %v645 = vcvt.s32.f32 %v581
  %v646 = vcvt.s32.f32 %v582
  %v647 = vcvt.s32.f32 %v583
  %v648 = vcvt.s32.f32 %v584
  %v649 = vcvt.s32.f32 %v585
  %v650 = vcvt.s32.f32 %v586
  %v651 = vcvt.s32.f32 %v587
  %v652 = vcvt.s32.f32 %v588
  %v653 = vcvt.s32.f32 %v589
  %v654 = vpack.c.bf16 %v594, %v590
  %v655 = vpack.c.bf16 %v595, %v591
  %v656 = vpack.c.bf16 %v596, %v592
  %v657 = vpack.c.bf16 %v597, %v593
  %v658 = vpack.c.bf16 %v602, %v598
  %v659 = vpack.c.bf16 %v603, %v599
  %v660 = vpack.c.bf16 %v604, %v600
  %v661 = vpack.c.bf16 %v605, %v601
  %v662 = vpack.c.bf16 %v610, %v606
  %v663 = vpack.c.bf16 %v611, %v607
  %v664 = vpack.c.bf16 %v612, %v608
  %v665 = vpack.c.bf16 %v613, %v609
  %v666 = vpack.c.bf16 %v618, %v614
  %v667 = vpack.c.bf16 %v619, %v615
  %v668 = vpack.c.bf16 %v620, %v616
  %v669 = vpack.c.bf16 %v621, %v617
  %v670 = vpack.c.bf16 %v626, %v622
  %v671 = vpack.c.bf16 %v627, %v623
  %v672 = vpack.c.bf16 %v628, %v624
  %v673 = vpack.c.bf16 %v629, %v625
  %v674 = vpack.c.bf16 %v634, %v630
  %v675 = vpack.c.bf16 %v635, %v631
  %v676 = vpack.c.bf16 %v636, %v632
  %v677 = vpack.c.bf16 %v637, %v633
  %v678 = vpack.c.bf16 %v642, %v638
  %v679 = vpack.c.bf16 %v643, %v639
  %v680 = vpack.c.bf16 %v644, %v640
  %v681 = vpack.c.bf16 %v645, %v641
  %v682 = vpack.c.bf16 %v650, %v646
  %v683 = vpack.c.bf16 %v651, %v647
  %v684 = vpack.c.bf16 %v652, %v648
  %v685 = vpack.c.bf16 %v653, %v649
  %686 = vmatprep.subr.bf16.mxu0 %v655
  %687 = vmatpush1.bf16.msra.mxu0 %v654
  %688 = vmatprep.subr.bf16.mxu0 %v659
  %689 = vmatpush1.bf16.msra.mxu0 %v658
  %690 = vmatprep.subr.bf16.mxu0 %v663
  %691 = vmatpush1.bf16.msra.mxu0 %v662
  %692 = vmatprep.subr.bf16.mxu0 %v667
  %693 = vmatpush1.bf16.msra.mxu0 %v666
  %694 = vmatprep.subr.bf16.mxu0 %v671
  %695 = vmatpush1.bf16.msra.mxu0 %v670
  %696 = vmatprep.subr.bf16.mxu0 %v675
  %697 = vmatpush1.bf16.msra.mxu0 %v674
  %698 = vmatprep.subr.bf16.mxu0 %v679
  %699 = vmatpush1.bf16.msra.mxu0 %v678
  %700 = vmatprep.subr.bf16.mxu0 %v683
  %701 = vmatpush1.bf16.msra.mxu0 %v682
  %702 = vmatprep.subr.bf16.mxu0 0
  %703 = vmatpush1.bf16.msra.mxu0 0
  %704 = vmatprep.subr.bf16.mxu0 0
  %705 = vmatpush1.bf16.msra.mxu0 0
  %706 = vmatprep.subr.bf16.mxu0 0
  %707 = vmatpush1.bf16.msra.mxu0 0
  %708 = vmatprep.subr.bf16.mxu0 0
  %709 = vmatpush1.bf16.msra.mxu0 0
  %710 = vmatprep.subr.bf16.mxu0 0
  %711 = vmatpush1.bf16.msra.mxu0 0
  %712 = vmatprep.subr.bf16.mxu0 0
  %713 = vmatpush1.bf16.msra.mxu0 0
  %714 = vmatprep.subr.bf16.mxu0 0
  %715 = vmatpush1.bf16.msra.mxu0 0
  %716 = vmatprep.subr.bf16.mxu0 0
  %717 = vmatpush1.bf16.msra.mxu0 0
  %718 = vmatprep.mubr.bf16.mxu0 0
  %719 = vmatmul.mubr.bf16.gmra.mrb[0].mxu0 %v306
  %v720 = vpop.f32.mrb[0].mxu0
  %v721 = vadd.f32 0.0, %v720
  %v722 = vpop.f32.mrb[0].mxu0
  %v723 = vadd.f32 0.0, %v722
  %v724 = vpop.f32.mrb[0].mxu0
  %v725 = vpop.f32.mrb[0].mxu0
  %726 = vmatprep.mubr.bf16.mxu0 0
  %727 = vmatmul.mubr.bf16.gmra.mrb[0].mxu0 %v307
  %v728 = vpop.f32.mrb[0].mxu0
  %v729 = vadd.f32 0.0, %v728
  %v730 = vpop.f32.mrb[0].mxu0
  %v731 = vadd.f32 0.0, %v730
  %v732 = vpop.f32.mrb[0].mxu0
  %v733 = vadd.f32 0.0, %v732
  %v734 = vpop.f32.mrb[0].mxu0
  %v735 = vadd.f32 0.0, %v734
  %736 = vmatprep.mubr.bf16.mxu0 0
  %737 = vmatmul.mubr.bf16.gmra.mrb[0].mxu0 %v308
  %v738 = vpop.f32.mrb[0].mxu0
  %v739 = vadd.f32 0.0, %v738
  %v740 = vpop.f32.mrb[0].mxu0
  %v741 = vadd.f32 0.0, %v740
  %v742 = vpop.f32.mrb[0].mxu0
  %v743 = vpop.f32.mrb[0].mxu0
  %744 = vdwg.mxu0
  %745 = vmatprep.subr.bf16.mxu0 %v657
  %746 = vmatpush1.bf16.msra.mxu0 %v656
  %747 = vmatprep.subr.bf16.mxu0 %v661
  %748 = vmatpush1.bf16.msra.mxu0 %v660
  %749 = vmatprep.subr.bf16.mxu0 %v665
  %750 = vmatpush1.bf16.msra.mxu0 %v664
  %751 = vmatprep.subr.bf16.mxu0 %v669
  %752 = vmatpush1.bf16.msra.mxu0 %v668
  %753 = vmatprep.subr.bf16.mxu0 %v673
  %754 = vmatpush1.bf16.msra.mxu0 %v672
  %755 = vmatprep.subr.bf16.mxu0 %v677
  %756 = vmatpush1.bf16.msra.mxu0 %v676
  %757 = vmatprep.subr.bf16.mxu0 %v681
  %758 = vmatpush1.bf16.msra.mxu0 %v680
  %759 = vmatprep.subr.bf16.mxu0 %v685
  %760 = vmatpush1.bf16.msra.mxu0 %v684
  %761 = vmatprep.subr.bf16.mxu0 0
  %762 = vmatpush1.bf16.msra.mxu0 0
  %763 = vmatprep.subr.bf16.mxu0 0
  %764 = vmatpush1.bf16.msra.mxu0 0
  %765 = vmatprep.subr.bf16.mxu0 0
  %766 = vmatpush1.bf16.msra.mxu0 0
  %767 = vmatprep.subr.bf16.mxu0 0
  %768 = vmatpush1.bf16.msra.mxu0 0
  %769 = vmatprep.subr.bf16.mxu0 0
  %770 = vmatpush1.bf16.msra.mxu0 0
  %771 = vmatprep.subr.bf16.mxu0 0
  %772 = vmatpush1.bf16.msra.mxu0 0
  %773 = vmatprep.subr.bf16.mxu0 0
  %774 = vmatpush1.bf16.msra.mxu0 0
  %775 = vmatprep.subr.bf16.mxu0 0
  %776 = vmatpush1.bf16.msra.mxu0 0
  %777 = vmatprep.mubr.bf16.mxu0 0
  %778 = vmatmul.mubr.bf16.gmra.mrb[0].mxu0 %v306
  %v779 = vpop.f32.mrb[0].mxu0
  %v780 = vadd.f32 0.0, %v779
  %v781 = vpop.f32.mrb[0].mxu0
  %v782 = vadd.f32 0.0, %v781
  %v783 = vpop.f32.mrb[0].mxu0
  %v784 = vpop.f32.mrb[0].mxu0
  %785 = vmatprep.mubr.bf16.mxu0 0
  %786 = vmatmul.mubr.bf16.gmra.mrb[0].mxu0 %v307
  %v787 = vpop.f32.mrb[0].mxu0
  %v788 = vadd.f32 0.0, %v787
  %v789 = vpop.f32.mrb[0].mxu0
  %v790 = vadd.f32 0.0, %v789
  %v791 = vpop.f32.mrb[0].mxu0
  %v792 = vadd.f32 0.0, %v791
  %v793 = vpop.f32.mrb[0].mxu0
  %v794 = vadd.f32 0.0, %v793
  %795 = vmatprep.mubr.bf16.mxu0 0
  %796 = vmatmul.mubr.bf16.gmra.mrb[0].mxu0 %v308
  %v797 = vpop.f32.mrb[0].mxu0
  %v798 = vadd.f32 0.0, %v797
  %v799 = vpop.f32.mrb[0].mxu0
  %v800 = vadd.f32 0.0, %v799
  %v801 = vpop.f32.mrb[0].mxu0
  %v802 = vpop.f32.mrb[0].mxu0
  %803 = vdwg.mxu0
  %v804 = vlaneseq
  %v805 = vshrl.u32 %v804, 7
  %v806 = vsub.s32 2, %v805
  %v807 = vrot.slane %v21, %v806
  %v808 = vlaneseq
  %v809 = vshrl.u32 %v808, 7
  %v810 = vsub.s32 6, %v809
  %v811 = vrot.slane %v21, %v810
  %v812 = vlaneseq
  %v813 = vshrl.u32 %v812, 7
  %v814 = vsub.s32 2, %v813
  %v815 = vrot.slane %v22, %v814
  %v816 = vlaneseq
  %v817 = vshrl.u32 %v816, 7
  %v818 = vsub.s32 6, %v817
  %v819 = vrot.slane %v22, %v818
  %v820 = vlaneseq
  %v821 = vshrl.u32 %v820, 7
  %v822 = vsub.s32 2, %v821
  %v823 = vrot.slane %v807, %v822
  %v824 = vlaneseq
  %v825 = vshrl.u32 %v824, 7
  %v826 = vsub.s32 2, %v825
  %v827 = vrot.slane %v811, %v826
  %v828 = vlaneseq
  %v829 = vshrl.u32 %v828, 7
  %v830 = vsub.s32 2, %v829
  %v831 = vrot.slane %v815, %v830
  %v832 = vlaneseq
  %v833 = vshrl.u32 %v832, 7
  %v834 = vsub.s32 2, %v833
  %v835 = vrot.slane %v819, %v834
  %vm836 = vcmp.eq.s32.totalorder %v24, %v823
  %vm837 = vcmp.eq.s32.totalorder %v24, %v827
  %vm838 = vcmp.eq.s32.totalorder %v24, %v831
  %vm839 = vcmp.eq.s32.totalorder %v24, %v835
  %vm840 = vcmp.eq.s32.totalorder %v25, %v823
  %vm841 = vcmp.eq.s32.totalorder %v25, %v827
  %vm842 = vcmp.eq.s32.totalorder %v25, %v831
  %vm843 = vcmp.eq.s32.totalorder %v25, %v835
  %vm844 = vcmp.eq.s32.totalorder %v26, %v823
  %vm845 = vcmp.eq.s32.totalorder %v26, %v827
  %vm846 = vcmp.eq.s32.totalorder %v26, %v831
  %vm847 = vcmp.eq.s32.totalorder %v26, %v835
  %vm848 = vcmp.eq.s32.totalorder %v27, %v823
  %vm849 = vcmp.eq.s32.totalorder %v27, %v827
  %vm850 = vcmp.eq.s32.totalorder %v27, %v831
  %vm851 = vcmp.eq.s32.totalorder %v27, %v835
  %vm852 = vcmp.eq.s32.totalorder %v28, %v823
  %vm853 = vcmp.eq.s32.totalorder %v28, %v827
  %vm854 = vcmp.eq.s32.totalorder %v28, %v831
  %vm855 = vcmp.eq.s32.totalorder %v28, %v835
  %vm856 = vcmp.eq.s32.totalorder %v29, %v823
  %vm857 = vcmp.eq.s32.totalorder %v29, %v827
  %vm858 = vcmp.eq.s32.totalorder %v29, %v831
  %vm859 = vcmp.eq.s32.totalorder %v29, %v835
  %vm860 = vcmp.eq.s32.totalorder %v30, %v823
  %vm861 = vcmp.eq.s32.totalorder %v30, %v827
  %vm862 = vcmp.eq.s32.totalorder %v30, %v831
  %vm863 = vcmp.eq.s32.totalorder %v30, %v835
  %vm864 = vcmp.eq.s32.totalorder %v31, %v823
  %vm865 = vcmp.eq.s32.totalorder %v31, %v827
  %vm866 = vcmp.eq.s32.totalorder %v31, %v831
  %vm867 = vcmp.eq.s32.totalorder %v31, %v835
  %vm868 = vcmp.eq.s32.totalorder %v32, %v823
  %vm869 = vcmp.eq.s32.totalorder %v32, %v827
  %vm870 = vcmp.eq.s32.totalorder %v32, %v831
  %vm871 = vcmp.eq.s32.totalorder %v32, %v835
  %vm872 = vcmp.eq.s32.totalorder %v33, %v823
  %vm873 = vcmp.eq.s32.totalorder %v33, %v827
  %vm874 = vcmp.eq.s32.totalorder %v33, %v831
  %vm875 = vcmp.eq.s32.totalorder %v33, %v835
  %vm876 = vcmp.eq.s32.totalorder %v34, %v823
  %vm877 = vcmp.eq.s32.totalorder %v34, %v827
  %vm878 = vcmp.eq.s32.totalorder %v34, %v831
  %vm879 = vcmp.eq.s32.totalorder %v34, %v835
  %vm880 = vcmp.eq.s32.totalorder %v35, %v823
  %vm881 = vcmp.eq.s32.totalorder %v35, %v827
  %vm882 = vcmp.eq.s32.totalorder %v35, %v831
  %vm883 = vcmp.eq.s32.totalorder %v35, %v835
  %vm884 = vcmp.eq.s32.totalorder %v36, %v823
  %vm885 = vcmp.eq.s32.totalorder %v36, %v827
  %vm886 = vcmp.eq.s32.totalorder %v36, %v831
  %vm887 = vcmp.eq.s32.totalorder %v36, %v835
  %vm888 = vcmp.eq.s32.totalorder %v37, %v823
  %vm889 = vcmp.eq.s32.totalorder %v37, %v827
  %vm890 = vcmp.eq.s32.totalorder %v37, %v831
  %vm891 = vcmp.eq.s32.totalorder %v37, %v835
  %vm892 = vcmp.eq.s32.totalorder %v38, %v823
  %vm893 = vcmp.eq.s32.totalorder %v38, %v827
  %vm894 = vcmp.eq.s32.totalorder %v38, %v831
  %vm895 = vcmp.eq.s32.totalorder %v38, %v835
  %vm896 = vcmp.eq.s32.totalorder %v39, %v823
  %vm897 = vcmp.eq.s32.totalorder %v39, %v827
  %vm898 = vcmp.eq.s32.totalorder %v39, %v831
  %vm899 = vcmp.eq.s32.totalorder %v39, %v835
  %v900 = vsel %vm836, 1, 0
  %v901 = vsel %vm837, 1, 0
  %v902 = vsel %vm838, 1, 0
  %v903 = vsel %vm839, 1, 0
  %v904 = vsel %vm840, 1, 0
  %v905 = vsel %vm841, 1, 0
  %v906 = vsel %vm842, 1, 0
  %v907 = vsel %vm843, 1, 0
  %v908 = vsel %vm844, 1, 0
  %v909 = vsel %vm845, 1, 0
  %v910 = vsel %vm846, 1, 0
  %v911 = vsel %vm847, 1, 0
  %v912 = vsel %vm848, 1, 0
  %v913 = vsel %vm849, 1, 0
  %v914 = vsel %vm850, 1, 0
  %v915 = vsel %vm851, 1, 0
  %v916 = vsel %vm852, 1, 0
  %v917 = vsel %vm853, 1, 0
  %v918 = vsel %vm854, 1, 0
  %v919 = vsel %vm855, 1, 0
  %v920 = vsel %vm856, 1, 0
  %v921 = vsel %vm857, 1, 0
  %v922 = vsel %vm858, 1, 0
  %v923 = vsel %vm859, 1, 0
  %v924 = vsel %vm860, 1, 0
  %v925 = vsel %vm861, 1, 0
  %v926 = vsel %vm862, 1, 0
  %v927 = vsel %vm863, 1, 0
  %v928 = vsel %vm864, 1, 0
  %v929 = vsel %vm865, 1, 0
  %v930 = vsel %vm866, 1, 0
  %v931 = vsel %vm867, 1, 0
  %v932 = vsel %vm868, 1, 0
  %v933 = vsel %vm869, 1, 0
  %v934 = vsel %vm870, 1, 0
  %v935 = vsel %vm871, 1, 0
  %v936 = vsel %vm872, 1, 0
  %v937 = vsel %vm873, 1, 0
  %v938 = vsel %vm874, 1, 0
  %v939 = vsel %vm875, 1, 0
  %v940 = vsel %vm876, 1, 0
  %v941 = vsel %vm877, 1, 0
  %v942 = vsel %vm878, 1, 0
  %v943 = vsel %vm879, 1, 0
  %v944 = vsel %vm880, 1, 0
  %v945 = vsel %vm881, 1, 0
  %v946 = vsel %vm882, 1, 0
  %v947 = vsel %vm883, 1, 0
  %v948 = vsel %vm884, 1, 0
  %v949 = vsel %vm885, 1, 0
  %v950 = vsel %vm886, 1, 0
  %v951 = vsel %vm887, 1, 0
  %v952 = vsel %vm888, 1, 0
  %v953 = vsel %vm889, 1, 0
  %v954 = vsel %vm890, 1, 0
  %v955 = vsel %vm891, 1, 0
  %v956 = vsel %vm892, 1, 0
  %v957 = vsel %vm893, 1, 0
  %v958 = vsel %vm894, 1, 0
  %v959 = vsel %vm895, 1, 0
  %v960 = vsel %vm896, 1, 0
  %v961 = vsel %vm897, 1, 0
  %v962 = vsel %vm898, 1, 0
  %v963 = vsel %vm899, 1, 0
  %v964 = vcvt.s32.f32 %v900
  %v965 = vcvt.s32.f32 %v901
  %v966 = vcvt.s32.f32 %v902
  %v967 = vcvt.s32.f32 %v903
  %v968 = vcvt.s32.f32 %v904
  %v969 = vcvt.s32.f32 %v905
  %v970 = vcvt.s32.f32 %v906
  %v971 = vcvt.s32.f32 %v907
  %v972 = vcvt.s32.f32 %v908
  %v973 = vcvt.s32.f32 %v909
  %v974 = vcvt.s32.f32 %v910
  %v975 = vcvt.s32.f32 %v911
  %v976 = vcvt.s32.f32 %v912
  %v977 = vcvt.s32.f32 %v913
  %v978 = vcvt.s32.f32 %v914
  %v979 = vcvt.s32.f32 %v915
  %v980 = vcvt.s32.f32 %v916
  %v981 = vcvt.s32.f32 %v917
  %v982 = vcvt.s32.f32 %v918
  %v983 = vcvt.s32.f32 %v919
  %v984 = vcvt.s32.f32 %v920
  %v985 = vcvt.s32.f32 %v921
  %v986 = vcvt.s32.f32 %v922
  %v987 = vcvt.s32.f32 %v923
  %v988 = vcvt.s32.f32 %v924
  %v989 = vcvt.s32.f32 %v925
  %v990 = vcvt.s32.f32 %v926
  %v991 = vcvt.s32.f32 %v927
  %v992 = vcvt.s32.f32 %v928
  %v993 = vcvt.s32.f32 %v929
  %v994 = vcvt.s32.f32 %v930
  %v995 = vcvt.s32.f32 %v931
  %v996 = vcvt.s32.f32 %v932
  %v997 = vcvt.s32.f32 %v933
  %v998 = vcvt.s32.f32 %v934
  %v999 = vcvt.s32.f32 %v935
  %v1000 = vcvt.s32.f32 %v936
  %v1001 = vcvt.s32.f32 %v937
  %v1002 = vcvt.s32.f32 %v938
  %v1003 = vcvt.s32.f32 %v939
  %v1004 = vcvt.s32.f32 %v940
  %v1005 = vcvt.s32.f32 %v941
  %v1006 = vcvt.s32.f32 %v942
  %v1007 = vcvt.s32.f32 %v943
  %v1008 = vcvt.s32.f32 %v944
  %v1009 = vcvt.s32.f32 %v945
  %v1010 = vcvt.s32.f32 %v946
  %v1011 = vcvt.s32.f32 %v947
  %v1012 = vcvt.s32.f32 %v948
  %v1013 = vcvt.s32.f32 %v949
  %v1014 = vcvt.s32.f32 %v950
  %v1015 = vcvt.s32.f32 %v951
  %v1016 = vcvt.s32.f32 %v952
  %v1017 = vcvt.s32.f32 %v953
  %v1018 = vcvt.s32.f32 %v954
  %v1019 = vcvt.s32.f32 %v955
  %v1020 = vcvt.s32.f32 %v956
  %v1021 = vcvt.s32.f32 %v957
  %v1022 = vcvt.s32.f32 %v958
  %v1023 = vcvt.s32.f32 %v959
  %v1024 = vcvt.s32.f32 %v960
  %v1025 = vcvt.s32.f32 %v961
  %v1026 = vcvt.s32.f32 %v962
  %v1027 = vcvt.s32.f32 %v963
  %v1028 = vpack.c.bf16 %v968, %v964
  %v1029 = vpack.c.bf16 %v969, %v965
  %v1030 = vpack.c.bf16 %v970, %v966
  %v1031 = vpack.c.bf16 %v971, %v967
  %v1032 = vpack.c.bf16 %v976, %v972
  %v1033 = vpack.c.bf16 %v977, %v973
  %v1034 = vpack.c.bf16 %v978, %v974
  %v1035 = vpack.c.bf16 %v979, %v975
  %v1036 = vpack.c.bf16 %v984, %v980
  %v1037 = vpack.c.bf16 %v985, %v981
  %v1038 = vpack.c.bf16 %v986, %v982
  %v1039 = vpack.c.bf16 %v987, %v983
  %v1040 = vpack.c.bf16 %v992, %v988
  %v1041 = vpack.c.bf16 %v993, %v989
  %v1042 = vpack.c.bf16 %v994, %v990
  %v1043 = vpack.c.bf16 %v995, %v991
  %v1044 = vpack.c.bf16 %v1000, %v996
  %v1045 = vpack.c.bf16 %v1001, %v997
  %v1046 = vpack.c.bf16 %v1002, %v998
  %v1047 = vpack.c.bf16 %v1003, %v999
  %v1048 = vpack.c.bf16 %v1008, %v1004
  %v1049 = vpack.c.bf16 %v1009, %v1005
  %v1050 = vpack.c.bf16 %v1010, %v1006
  %v1051 = vpack.c.bf16 %v1011, %v1007
  %v1052 = vpack.c.bf16 %v1016, %v1012
  %v1053 = vpack.c.bf16 %v1017, %v1013
  %v1054 = vpack.c.bf16 %v1018, %v1014
  %v1055 = vpack.c.bf16 %v1019, %v1015
  %v1056 = vpack.c.bf16 %v1024, %v1020
  %v1057 = vpack.c.bf16 %v1025, %v1021
  %v1058 = vpack.c.bf16 %v1026, %v1022
  %v1059 = vpack.c.bf16 %v1027, %v1023
  %1060 = vmatprep.subr.bf16.mxu0 %v1029
  %1061 = vmatpush1.bf16.msra.mxu0 %v1028
  %1062 = vmatprep.subr.bf16.mxu0 %v1033
  %1063 = vmatpush1.bf16.msra.mxu0 %v1032
  %1064 = vmatprep.subr.bf16.mxu0 %v1037
  %1065 = vmatpush1.bf16.msra.mxu0 %v1036
  %1066 = vmatprep.subr.bf16.mxu0 %v1041
  %1067 = vmatpush1.bf16.msra.mxu0 %v1040
  %1068 = vmatprep.subr.bf16.mxu0 %v1045
  %1069 = vmatpush1.bf16.msra.mxu0 %v1044
  %1070 = vmatprep.subr.bf16.mxu0 %v1049
  %1071 = vmatpush1.bf16.msra.mxu0 %v1048
  %1072 = vmatprep.subr.bf16.mxu0 %v1053
  %1073 = vmatpush1.bf16.msra.mxu0 %v1052
  %1074 = vmatprep.subr.bf16.mxu0 %v1057
  %1075 = vmatpush1.bf16.msra.mxu0 %v1056
  %1076 = vmatprep.subr.bf16.mxu0 0
  %1077 = vmatpush1.bf16.msra.mxu0 0
  %1078 = vmatprep.subr.bf16.mxu0 0
  %1079 = vmatpush1.bf16.msra.mxu0 0
  %1080 = vmatprep.subr.bf16.mxu0 0
  %1081 = vmatpush1.bf16.msra.mxu0 0
  %1082 = vmatprep.subr.bf16.mxu0 0
  %1083 = vmatpush1.bf16.msra.mxu0 0
  %1084 = vmatprep.subr.bf16.mxu0 0
  %1085 = vmatpush1.bf16.msra.mxu0 0
  %1086 = vmatprep.subr.bf16.mxu0 0
  %1087 = vmatpush1.bf16.msra.mxu0 0
  %1088 = vmatprep.subr.bf16.mxu0 0
  %1089 = vmatpush1.bf16.msra.mxu0 0
  %1090 = vmatprep.subr.bf16.mxu0 0
  %1091 = vmatpush1.bf16.msra.mxu0 0
  %1092 = vmatprep.mubr.bf16.mxu0 0
  %1093 = vmatmul.mubr.bf16.gmra.mrb[0].mxu0 %v306
  %v1094 = vpop.f32.mrb[0].mxu0
  %v1095 = vadd.f32 0.0, %v1094
  %v1096 = vpop.f32.mrb[0].mxu0
  %v1097 = vadd.f32 0.0, %v1096
  %v1098 = vpop.f32.mrb[0].mxu0
  %v1099 = vadd.f32 0.0, %v1098
  %v1100 = vpop.f32.mrb[0].mxu0
  %v1101 = vadd.f32 0.0, %v1100
  %1102 = vmatprep.mubr.bf16.mxu0 0
  %1103 = vmatmul.mubr.bf16.gmra.mrb[0].mxu0 %v307
  %v1104 = vpop.f32.mrb[0].mxu0
  %v1105 = vpop.f32.mrb[0].mxu0
  %v1106 = vpop.f32.mrb[0].mxu0
  %v1107 = vadd.f32 0.0, %v1106
  %v1108 = vpop.f32.mrb[0].mxu0
  %v1109 = vadd.f32 0.0, %v1108
  %1110 = vmatprep.mubr.bf16.mxu0 0
  %1111 = vmatmul.mubr.bf16.gmra.mrb[0].mxu0 %v308
  %v1112 = vpop.f32.mrb[0].mxu0
  %v1113 = vadd.f32 0.0, %v1112
  %v1114 = vpop.f32.mrb[0].mxu0
  %v1115 = vadd.f32 0.0, %v1114
  %v1116 = vpop.f32.mrb[0].mxu0
  %v1117 = vpop.f32.mrb[0].mxu0
  %1118 = vdwg.mxu0
  %1119 = vmatprep.subr.bf16.mxu0 %v1031
  %1120 = vmatpush1.bf16.msra.mxu0 %v1030
  %1121 = vmatprep.subr.bf16.mxu0 %v1035
  %1122 = vmatpush1.bf16.msra.mxu0 %v1034
  %1123 = vmatprep.subr.bf16.mxu0 %v1039
  %1124 = vmatpush1.bf16.msra.mxu0 %v1038
  %1125 = vmatprep.subr.bf16.mxu0 %v1043
  %1126 = vmatpush1.bf16.msra.mxu0 %v1042
  %1127 = vmatprep.subr.bf16.mxu0 %v1047
  %1128 = vmatpush1.bf16.msra.mxu0 %v1046
  %1129 = vmatprep.subr.bf16.mxu0 %v1051
  %1130 = vmatpush1.bf16.msra.mxu0 %v1050
  %1131 = vmatprep.subr.bf16.mxu0 %v1055
  %1132 = vmatpush1.bf16.msra.mxu0 %v1054
  %1133 = vmatprep.subr.bf16.mxu0 %v1059
  %1134 = vmatpush1.bf16.msra.mxu0 %v1058
  %1135 = vmatprep.subr.bf16.mxu0 0
  %1136 = vmatpush1.bf16.msra.mxu0 0
  %1137 = vmatprep.subr.bf16.mxu0 0
  %1138 = vmatpush1.bf16.msra.mxu0 0
  %1139 = vmatprep.subr.bf16.mxu0 0
  %1140 = vmatpush1.bf16.msra.mxu0 0
  %1141 = vmatprep.subr.bf16.mxu0 0
  %1142 = vmatpush1.bf16.msra.mxu0 0
  %1143 = vmatprep.subr.bf16.mxu0 0
  %1144 = vmatpush1.bf16.msra.mxu0 0
  %1145 = vmatprep.subr.bf16.mxu0 0
  %1146 = vmatpush1.bf16.msra.mxu0 0
  %1147 = vmatprep.subr.bf16.mxu0 0
  %1148 = vmatpush1.bf16.msra.mxu0 0
  %1149 = vmatprep.subr.bf16.mxu0 0
  %1150 = vmatpush1.bf16.msra.mxu0 0
  %1151 = vmatprep.mubr.bf16.mxu0 0
  %1152 = vmatmul.mubr.bf16.gmra.mrb[0].mxu0 %v306
  %v1153 = vpop.f32.mrb[0].mxu0
  %v1154 = vadd.f32 0.0, %v1153
  %v1155 = vpop.f32.mrb[0].mxu0
  %v1156 = vadd.f32 0.0, %v1155
  %v1157 = vpop.f32.mrb[0].mxu0
  %v1158 = vadd.f32 0.0, %v1157
  %v1159 = vpop.f32.mrb[0].mxu0
  %v1160 = vadd.f32 0.0, %v1159
  %1161 = vmatprep.mubr.bf16.mxu0 0
  %1162 = vmatmul.mubr.bf16.gmra.mrb[0].mxu0 %v307
  %v1163 = vpop.f32.mrb[0].mxu0
  %v1164 = vpop.f32.mrb[0].mxu0
  %v1165 = vpop.f32.mrb[0].mxu0
  %v1166 = vadd.f32 0.0, %v1165
  %v1167 = vpop.f32.mrb[0].mxu0
  %v1168 = vadd.f32 0.0, %v1167
  %1169 = vmatprep.mubr.bf16.mxu0 0
  %1170 = vmatmul.mubr.bf16.gmra.mrb[0].mxu0 %v308
  %v1171 = vpop.f32.mrb[0].mxu0
  %v1172 = vadd.f32 0.0, %v1171
  %v1173 = vpop.f32.mrb[0].mxu0
  %v1174 = vadd.f32 0.0, %v1173
  %v1175 = vpop.f32.mrb[0].mxu0
  %v1176 = vpop.f32.mrb[0].mxu0
  %1177 = vdwg.mxu0
  %v1178 = vlaneseq
  %v1179 = vshrl.u32 %v1178, 7
  %v1180 = vsub.s32 3, %v1179
  %v1181 = vrot.slane %v21, %v1180
  %v1182 = vlaneseq
  %v1183 = vshrl.u32 %v1182, 7
  %v1184 = vsub.s32 7, %v1183
  %v1185 = vrot.slane %v21, %v1184
  %v1186 = vlaneseq
  %v1187 = vshrl.u32 %v1186, 7
  %v1188 = vsub.s32 3, %v1187
  %v1189 = vrot.slane %v22, %v1188
  %v1190 = vlaneseq
  %v1191 = vshrl.u32 %v1190, 7
  %v1192 = vsub.s32 7, %v1191
  %v1193 = vrot.slane %v22, %v1192
  %v1194 = vlaneseq
  %v1195 = vshrl.u32 %v1194, 7
  %v1196 = vsub.s32 3, %v1195
  %v1197 = vrot.slane %v1181, %v1196
  %v1198 = vlaneseq
  %v1199 = vshrl.u32 %v1198, 7
  %v1200 = vsub.s32 3, %v1199
  %v1201 = vrot.slane %v1185, %v1200
  %v1202 = vlaneseq
  %v1203 = vshrl.u32 %v1202, 7
  %v1204 = vsub.s32 3, %v1203
  %v1205 = vrot.slane %v1189, %v1204
  %v1206 = vlaneseq
  %v1207 = vshrl.u32 %v1206, 7
  %v1208 = vsub.s32 3, %v1207
  %v1209 = vrot.slane %v1193, %v1208
  %vm1210 = vcmp.eq.s32.totalorder %v24, %v1197
  %vm1211 = vcmp.eq.s32.totalorder %v24, %v1201
  %vm1212 = vcmp.eq.s32.totalorder %v24, %v1205
  %vm1213 = vcmp.eq.s32.totalorder %v24, %v1209
  %vm1214 = vcmp.eq.s32.totalorder %v25, %v1197
  %vm1215 = vcmp.eq.s32.totalorder %v25, %v1201
  %vm1216 = vcmp.eq.s32.totalorder %v25, %v1205
  %vm1217 = vcmp.eq.s32.totalorder %v25, %v1209
  %vm1218 = vcmp.eq.s32.totalorder %v26, %v1197
  %vm1219 = vcmp.eq.s32.totalorder %v26, %v1201
  %vm1220 = vcmp.eq.s32.totalorder %v26, %v1205
  %vm1221 = vcmp.eq.s32.totalorder %v26, %v1209
  %vm1222 = vcmp.eq.s32.totalorder %v27, %v1197
  %vm1223 = vcmp.eq.s32.totalorder %v27, %v1201
  %vm1224 = vcmp.eq.s32.totalorder %v27, %v1205
  %vm1225 = vcmp.eq.s32.totalorder %v27, %v1209
  %vm1226 = vcmp.eq.s32.totalorder %v28, %v1197
  %vm1227 = vcmp.eq.s32.totalorder %v28, %v1201
  %vm1228 = vcmp.eq.s32.totalorder %v28, %v1205
  %vm1229 = vcmp.eq.s32.totalorder %v28, %v1209
  %vm1230 = vcmp.eq.s32.totalorder %v29, %v1197
  %vm1231 = vcmp.eq.s32.totalorder %v29, %v1201
  %vm1232 = vcmp.eq.s32.totalorder %v29, %v1205
  %vm1233 = vcmp.eq.s32.totalorder %v29, %v1209
  %vm1234 = vcmp.eq.s32.totalorder %v30, %v1197
  %vm1235 = vcmp.eq.s32.totalorder %v30, %v1201
  %vm1236 = vcmp.eq.s32.totalorder %v30, %v1205
  %vm1237 = vcmp.eq.s32.totalorder %v30, %v1209
  %vm1238 = vcmp.eq.s32.totalorder %v31, %v1197
  %vm1239 = vcmp.eq.s32.totalorder %v31, %v1201
  %vm1240 = vcmp.eq.s32.totalorder %v31, %v1205
  %vm1241 = vcmp.eq.s32.totalorder %v31, %v1209
  %vm1242 = vcmp.eq.s32.totalorder %v32, %v1197
  %vm1243 = vcmp.eq.s32.totalorder %v32, %v1201
  %vm1244 = vcmp.eq.s32.totalorder %v32, %v1205
  %vm1245 = vcmp.eq.s32.totalorder %v32, %v1209
  %vm1246 = vcmp.eq.s32.totalorder %v33, %v1197
  %vm1247 = vcmp.eq.s32.totalorder %v33, %v1201
  %vm1248 = vcmp.eq.s32.totalorder %v33, %v1205
  %vm1249 = vcmp.eq.s32.totalorder %v33, %v1209
  %vm1250 = vcmp.eq.s32.totalorder %v34, %v1197
  %vm1251 = vcmp.eq.s32.totalorder %v34, %v1201
  %vm1252 = vcmp.eq.s32.totalorder %v34, %v1205
  %vm1253 = vcmp.eq.s32.totalorder %v34, %v1209
  %vm1254 = vcmp.eq.s32.totalorder %v35, %v1197
  %vm1255 = vcmp.eq.s32.totalorder %v35, %v1201
  %vm1256 = vcmp.eq.s32.totalorder %v35, %v1205
  %vm1257 = vcmp.eq.s32.totalorder %v35, %v1209
  %vm1258 = vcmp.eq.s32.totalorder %v36, %v1197
  %vm1259 = vcmp.eq.s32.totalorder %v36, %v1201
  %vm1260 = vcmp.eq.s32.totalorder %v36, %v1205
  %vm1261 = vcmp.eq.s32.totalorder %v36, %v1209
  %vm1262 = vcmp.eq.s32.totalorder %v37, %v1197
  %vm1263 = vcmp.eq.s32.totalorder %v37, %v1201
  %vm1264 = vcmp.eq.s32.totalorder %v37, %v1205
  %vm1265 = vcmp.eq.s32.totalorder %v37, %v1209
  %vm1266 = vcmp.eq.s32.totalorder %v38, %v1197
  %vm1267 = vcmp.eq.s32.totalorder %v38, %v1201
  %vm1268 = vcmp.eq.s32.totalorder %v38, %v1205
  %vm1269 = vcmp.eq.s32.totalorder %v38, %v1209
  %vm1270 = vcmp.eq.s32.totalorder %v39, %v1197
  %vm1271 = vcmp.eq.s32.totalorder %v39, %v1201
  %vm1272 = vcmp.eq.s32.totalorder %v39, %v1205
  %vm1273 = vcmp.eq.s32.totalorder %v39, %v1209
  %v1274 = vsel %vm1210, 1, 0
  %v1275 = vsel %vm1211, 1, 0
  %v1276 = vsel %vm1212, 1, 0
  %v1277 = vsel %vm1213, 1, 0
  %v1278 = vsel %vm1214, 1, 0
  %v1279 = vsel %vm1215, 1, 0
  %v1280 = vsel %vm1216, 1, 0
  %v1281 = vsel %vm1217, 1, 0
  %v1282 = vsel %vm1218, 1, 0
  %v1283 = vsel %vm1219, 1, 0
  %v1284 = vsel %vm1220, 1, 0
  %v1285 = vsel %vm1221, 1, 0
  %v1286 = vsel %vm1222, 1, 0
  %v1287 = vsel %vm1223, 1, 0
  %v1288 = vsel %vm1224, 1, 0
  %v1289 = vsel %vm1225, 1, 0
  %v1290 = vsel %vm1226, 1, 0
  %v1291 = vsel %vm1227, 1, 0
  %v1292 = vsel %vm1228, 1, 0
  %v1293 = vsel %vm1229, 1, 0
  %v1294 = vsel %vm1230, 1, 0
  %v1295 = vsel %vm1231, 1, 0
  %v1296 = vsel %vm1232, 1, 0
  %v1297 = vsel %vm1233, 1, 0
  %v1298 = vsel %vm1234, 1, 0
  %v1299 = vsel %vm1235, 1, 0
  %v1300 = vsel %vm1236, 1, 0
  %v1301 = vsel %vm1237, 1, 0
  %v1302 = vsel %vm1238, 1, 0
  %v1303 = vsel %vm1239, 1, 0
  %v1304 = vsel %vm1240, 1, 0
  %v1305 = vsel %vm1241, 1, 0
  %v1306 = vsel %vm1242, 1, 0
  %v1307 = vsel %vm1243, 1, 0
  %v1308 = vsel %vm1244, 1, 0
  %v1309 = vsel %vm1245, 1, 0
  %v1310 = vsel %vm1246, 1, 0
  %v1311 = vsel %vm1247, 1, 0
  %v1312 = vsel %vm1248, 1, 0
  %v1313 = vsel %vm1249, 1, 0
  %v1314 = vsel %vm1250, 1, 0
  %v1315 = vsel %vm1251, 1, 0
  %v1316 = vsel %vm1252, 1, 0
  %v1317 = vsel %vm1253, 1, 0
  %v1318 = vsel %vm1254, 1, 0
  %v1319 = vsel %vm1255, 1, 0
  %v1320 = vsel %vm1256, 1, 0
  %v1321 = vsel %vm1257, 1, 0
  %v1322 = vsel %vm1258, 1, 0
  %v1323 = vsel %vm1259, 1, 0
  %v1324 = vsel %vm1260, 1, 0
  %v1325 = vsel %vm1261, 1, 0
  %v1326 = vsel %vm1262, 1, 0
  %v1327 = vsel %vm1263, 1, 0
  %v1328 = vsel %vm1264, 1, 0
  %v1329 = vsel %vm1265, 1, 0
  %v1330 = vsel %vm1266, 1, 0
  %v1331 = vsel %vm1267, 1, 0
  %v1332 = vsel %vm1268, 1, 0
  %v1333 = vsel %vm1269, 1, 0
  %v1334 = vsel %vm1270, 1, 0
  %v1335 = vsel %vm1271, 1, 0
  %v1336 = vsel %vm1272, 1, 0
  %v1337 = vsel %vm1273, 1, 0
  %v1338 = vcvt.s32.f32 %v1274
  %v1339 = vcvt.s32.f32 %v1275
  %v1340 = vcvt.s32.f32 %v1276
  %v1341 = vcvt.s32.f32 %v1277
  %v1342 = vcvt.s32.f32 %v1278
  %v1343 = vcvt.s32.f32 %v1279
  %v1344 = vcvt.s32.f32 %v1280
  %v1345 = vcvt.s32.f32 %v1281
  %v1346 = vcvt.s32.f32 %v1282
  %v1347 = vcvt.s32.f32 %v1283
  %v1348 = vcvt.s32.f32 %v1284
  %v1349 = vcvt.s32.f32 %v1285
  %v1350 = vcvt.s32.f32 %v1286
  %v1351 = vcvt.s32.f32 %v1287
  %v1352 = vcvt.s32.f32 %v1288
  %v1353 = vcvt.s32.f32 %v1289
  %v1354 = vcvt.s32.f32 %v1290
  %v1355 = vcvt.s32.f32 %v1291
  %v1356 = vcvt.s32.f32 %v1292
  %v1357 = vcvt.s32.f32 %v1293
  %v1358 = vcvt.s32.f32 %v1294
  %v1359 = vcvt.s32.f32 %v1295
  %v1360 = vcvt.s32.f32 %v1296
  %v1361 = vcvt.s32.f32 %v1297
  %v1362 = vcvt.s32.f32 %v1298
  %v1363 = vcvt.s32.f32 %v1299
  %v1364 = vcvt.s32.f32 %v1300
  %v1365 = vcvt.s32.f32 %v1301
  %v1366 = vcvt.s32.f32 %v1302
  %v1367 = vcvt.s32.f32 %v1303
  %v1368 = vcvt.s32.f32 %v1304
  %v1369 = vcvt.s32.f32 %v1305
  %v1370 = vcvt.s32.f32 %v1306
  %v1371 = vcvt.s32.f32 %v1307
  %v1372 = vcvt.s32.f32 %v1308
  %v1373 = vcvt.s32.f32 %v1309
  %v1374 = vcvt.s32.f32 %v1310
  %v1375 = vcvt.s32.f32 %v1311
  %v1376 = vcvt.s32.f32 %v1312
  %v1377 = vcvt.s32.f32 %v1313
  %v1378 = vcvt.s32.f32 %v1314
  %v1379 = vcvt.s32.f32 %v1315
  %v1380 = vcvt.s32.f32 %v1316
  %v1381 = vcvt.s32.f32 %v1317
  %v1382 = vcvt.s32.f32 %v1318
  %v1383 = vcvt.s32.f32 %v1319
  %v1384 = vcvt.s32.f32 %v1320
  %v1385 = vcvt.s32.f32 %v1321
  %v1386 = vcvt.s32.f32 %v1322
  %v1387 = vcvt.s32.f32 %v1323
  %v1388 = vcvt.s32.f32 %v1324
  %v1389 = vcvt.s32.f32 %v1325
  %v1390 = vcvt.s32.f32 %v1326
  %v1391 = vcvt.s32.f32 %v1327
  %v1392 = vcvt.s32.f32 %v1328
  %v1393 = vcvt.s32.f32 %v1329
  %v1394 = vcvt.s32.f32 %v1330
  %v1395 = vcvt.s32.f32 %v1331
  %v1396 = vcvt.s32.f32 %v1332
  %v1397 = vcvt.s32.f32 %v1333
  %v1398 = vcvt.s32.f32 %v1334
  %v1399 = vcvt.s32.f32 %v1335
  %v1400 = vcvt.s32.f32 %v1336
  %v1401 = vcvt.s32.f32 %v1337
  %v1402 = vpack.c.bf16 %v1342, %v1338
  %v1403 = vpack.c.bf16 %v1343, %v1339
  %v1404 = vpack.c.bf16 %v1344, %v1340
  %v1405 = vpack.c.bf16 %v1345, %v1341
  %v1406 = vpack.c.bf16 %v1350, %v1346
  %v1407 = vpack.c.bf16 %v1351, %v1347
  %v1408 = vpack.c.bf16 %v1352, %v1348
  %v1409 = vpack.c.bf16 %v1353, %v1349
  %v1410 = vpack.c.bf16 %v1358, %v1354
  %v1411 = vpack.c.bf16 %v1359, %v1355
  %v1412 = vpack.c.bf16 %v1360, %v1356
  %v1413 = vpack.c.bf16 %v1361, %v1357
  %v1414 = vpack.c.bf16 %v1366, %v1362
  %v1415 = vpack.c.bf16 %v1367, %v1363
  %v1416 = vpack.c.bf16 %v1368, %v1364
  %v1417 = vpack.c.bf16 %v1369, %v1365
  %v1418 = vpack.c.bf16 %v1374, %v1370
  %v1419 = vpack.c.bf16 %v1375, %v1371
  %v1420 = vpack.c.bf16 %v1376, %v1372
  %v1421 = vpack.c.bf16 %v1377, %v1373
  %v1422 = vpack.c.bf16 %v1382, %v1378
  %v1423 = vpack.c.bf16 %v1383, %v1379
  %v1424 = vpack.c.bf16 %v1384, %v1380
  %v1425 = vpack.c.bf16 %v1385, %v1381
  %v1426 = vpack.c.bf16 %v1390, %v1386
  %v1427 = vpack.c.bf16 %v1391, %v1387
  %v1428 = vpack.c.bf16 %v1392, %v1388
  %v1429 = vpack.c.bf16 %v1393, %v1389
  %v1430 = vpack.c.bf16 %v1398, %v1394
  %v1431 = vpack.c.bf16 %v1399, %v1395
  %v1432 = vpack.c.bf16 %v1400, %v1396
  %v1433 = vpack.c.bf16 %v1401, %v1397
  %1434 = vmatprep.subr.bf16.mxu0 %v1403
  %1435 = vmatpush1.bf16.msra.mxu0 %v1402
  %1436 = vmatprep.subr.bf16.mxu0 %v1407
  %1437 = vmatpush1.bf16.msra.mxu0 %v1406
  %1438 = vmatprep.subr.bf16.mxu0 %v1411
  %1439 = vmatpush1.bf16.msra.mxu0 %v1410
  %1440 = vmatprep.subr.bf16.mxu0 %v1415
  %1441 = vmatpush1.bf16.msra.mxu0 %v1414
  %1442 = vmatprep.subr.bf16.mxu0 %v1419
  %1443 = vmatpush1.bf16.msra.mxu0 %v1418
  %1444 = vmatprep.subr.bf16.mxu0 %v1423
  %1445 = vmatpush1.bf16.msra.mxu0 %v1422
  %1446 = vmatprep.subr.bf16.mxu0 %v1427
  %1447 = vmatpush1.bf16.msra.mxu0 %v1426
  %1448 = vmatprep.subr.bf16.mxu0 %v1431
  %1449 = vmatpush1.bf16.msra.mxu0 %v1430
  %1450 = vmatprep.subr.bf16.mxu0 0
  %1451 = vmatpush1.bf16.msra.mxu0 0
  %1452 = vmatprep.subr.bf16.mxu0 0
  %1453 = vmatpush1.bf16.msra.mxu0 0
  %1454 = vmatprep.subr.bf16.mxu0 0
  %1455 = vmatpush1.bf16.msra.mxu0 0
  %1456 = vmatprep.subr.bf16.mxu0 0
  %1457 = vmatpush1.bf16.msra.mxu0 0
  %1458 = vmatprep.subr.bf16.mxu0 0
  %1459 = vmatpush1.bf16.msra.mxu0 0
  %1460 = vmatprep.subr.bf16.mxu0 0
  %1461 = vmatpush1.bf16.msra.mxu0 0
  %1462 = vmatprep.subr.bf16.mxu0 0
  %1463 = vmatpush1.bf16.msra.mxu0 0
  %1464 = vmatprep.subr.bf16.mxu0 0
  %1465 = vmatpush1.bf16.msra.mxu0 0
  %1466 = vmatprep.mubr.bf16.mxu0 0
  %1467 = vmatmul.mubr.bf16.gmra.mrb[0].mxu0 %v306
  %v1468 = vpop.f32.mrb[0].mxu0
  %v1469 = vadd.f32 0.0, %v1468
  %v1470 = vpop.f32.mrb[0].mxu0
  %v1471 = vadd.f32 0.0, %v1470
  %v1472 = vpop.f32.mrb[0].mxu0
  %v1473 = vadd.f32 0.0, %v1472
  %v1474 = vpop.f32.mrb[0].mxu0
  %v1475 = vadd.f32 0.0, %v1474
  %1476 = vmatprep.mubr.bf16.mxu0 0
  %1477 = vmatmul.mubr.bf16.gmra.mrb[0].mxu0 %v307
  %v1478 = vpop.f32.mrb[0].mxu0
  %v1479 = vadd.f32 0.0, %v1478
  %v1480 = vpop.f32.mrb[0].mxu0
  %v1481 = vadd.f32 0.0, %v1480
  %v1482 = vpop.f32.mrb[0].mxu0
  %v1483 = vpop.f32.mrb[0].mxu0
  %1484 = vmatprep.mubr.bf16.mxu0 0
  %1485 = vmatmul.mubr.bf16.gmra.mrb[0].mxu0 %v308
  %v1486 = vpop.f32.mrb[0].mxu0
  %v1487 = vadd.f32 0.0, %v1486
  %v1488 = vpop.f32.mrb[0].mxu0
  %v1489 = vadd.f32 0.0, %v1488
  %v1490 = vpop.f32.mrb[0].mxu0
  %v1491 = vpop.f32.mrb[0].mxu0
  %1492 = vdwg.mxu0
  %1493 = vmatprep.subr.bf16.mxu0 %v1405
  %1494 = vmatpush1.bf16.msra.mxu0 %v1404
  %1495 = vmatprep.subr.bf16.mxu0 %v1409
  %1496 = vmatpush1.bf16.msra.mxu0 %v1408
  %1497 = vmatprep.subr.bf16.mxu0 %v1413
  %1498 = vmatpush1.bf16.msra.mxu0 %v1412
  %1499 = vmatprep.subr.bf16.mxu0 %v1417
  %1500 = vmatpush1.bf16.msra.mxu0 %v1416
  %1501 = vmatprep.subr.bf16.mxu0 %v1421
  %1502 = vmatpush1.bf16.msra.mxu0 %v1420
  %1503 = vmatprep.subr.bf16.mxu0 %v1425
  %1504 = vmatpush1.bf16.msra.mxu0 %v1424
  %1505 = vmatprep.subr.bf16.mxu0 %v1429
  %1506 = vmatpush1.bf16.msra.mxu0 %v1428
  %1507 = vmatprep.subr.bf16.mxu0 %v1433
  %1508 = vmatpush1.bf16.msra.mxu0 %v1432
  %1509 = vmatprep.subr.bf16.mxu0 0
  %1510 = vmatpush1.bf16.msra.mxu0 0
  %1511 = vmatprep.subr.bf16.mxu0 0
  %1512 = vmatpush1.bf16.msra.mxu0 0
  %1513 = vmatprep.subr.bf16.mxu0 0
  %1514 = vmatpush1.bf16.msra.mxu0 0
  %1515 = vmatprep.subr.bf16.mxu0 0
  %1516 = vmatpush1.bf16.msra.mxu0 0
  %1517 = vmatprep.subr.bf16.mxu0 0
  %1518 = vmatpush1.bf16.msra.mxu0 0
  %1519 = vmatprep.subr.bf16.mxu0 0
  %1520 = vmatpush1.bf16.msra.mxu0 0
  %1521 = vmatprep.subr.bf16.mxu0 0
  %1522 = vmatpush1.bf16.msra.mxu0 0
  %1523 = vmatprep.subr.bf16.mxu0 0
  %1524 = vmatpush1.bf16.msra.mxu0 0
  %1525 = vmatprep.mubr.bf16.mxu0 0
  %1526 = vmatmul.mubr.bf16.gmra.mrb[0].mxu0 %v306
  %v1527 = vpop.f32.mrb[0].mxu0
  %v1528 = vadd.f32 0.0, %v1527
  %v1529 = vpop.f32.mrb[0].mxu0
  %v1530 = vadd.f32 0.0, %v1529
  %v1531 = vpop.f32.mrb[0].mxu0
  %v1532 = vadd.f32 0.0, %v1531
  %v1533 = vpop.f32.mrb[0].mxu0
  %v1534 = vadd.f32 0.0, %v1533
  %1535 = vmatprep.mubr.bf16.mxu0 0
  %1536 = vmatmul.mubr.bf16.gmra.mrb[0].mxu0 %v307
  %v1537 = vpop.f32.mrb[0].mxu0
  %v1538 = vadd.f32 0.0, %v1537
  %v1539 = vpop.f32.mrb[0].mxu0
  %v1540 = vadd.f32 0.0, %v1539
  %v1541 = vpop.f32.mrb[0].mxu0
  %v1542 = vpop.f32.mrb[0].mxu0
  %1543 = vmatprep.mubr.bf16.mxu0 0
  %1544 = vmatmul.mubr.bf16.gmra.mrb[0].mxu0 %v308
  %v1545 = vpop.f32.mrb[0].mxu0
  %v1546 = vadd.f32 0.0, %v1545
  %v1547 = vpop.f32.mrb[0].mxu0
  %v1548 = vadd.f32 0.0, %v1547
  %v1549 = vpop.f32.mrb[0].mxu0
  %v1550 = vpop.f32.mrb[0].mxu0
  %1551 = vdwg.mxu0
  %s1552 = sld [smem:[#allocation2]]
  %v1553 = vadd.f32 %v365, 0.0
  %v1554 = vadd.f32 %v367, 0.0
  %v1555 = vadd.f32 %v424, 0.0
  %v1556 = vadd.f32 %v426, 0.0
  %v1557 = vadd.f32 %v1553, %v739
  %v1558 = vadd.f32 %v1554, %v741
  %v1559 = vadd.f32 %v1555, %v798
  %v1560 = vadd.f32 %v1556, %v800
  %v1561 = vadd.f32 %v1557, %v1113
  %v1562 = vadd.f32 %v1558, %v1115
  %v1563 = vadd.f32 %v1559, %v1172
  %v1564 = vadd.f32 %v1560, %v1174
  %v1565 = vadd.f32 %v1561, %v1487
  %v1566 = vadd.f32 %v1562, %v1489
  %v1567 = vadd.f32 %v1563, %v1546
  %v1568 = vadd.f32 %v1564, %v1548
  %v1569 = vstv %s1552
  %v1570 = vadd.f32 %v1569, %v1565
  %v1571 = vadd.f32 %v1569, %v1566
  %v1572 = vadd.f32 %v1569, %v1567
  %v1573 = vadd.f32 %v1569, %v1568
  %v1574 = vmul.f32 %v349, %v721
  %v1575 = vmul.f32 %v351, %v723
  %v1576 = vmul.f32 %v408, %v780
  %v1577 = vmul.f32 %v410, %v782
  %v1578 = vrot.slane %v1574, 4
  %v1579 = vadd.f32 %v1574, %v1578
  %v1580 = vrot.slane %v1579, 2
  %v1581 = vadd.f32 %v1579, %v1580
  %v1582 = vrot.slane %v1581, 1
  %v1583 = vadd.f32 %v1581, %v1582
  %v1584 = vrot.slane %v1575, 4
  %v1585 = vadd.f32 %v1575, %v1584
  %v1586 = vrot.slane %v1585, 2
  %v1587 = vadd.f32 %v1585, %v1586
  %v1588 = vrot.slane %v1587, 1
  %v1589 = vadd.f32 %v1587, %v1588
  %v1590 = vrot.slane %v1576, 4
  %v1591 = vadd.f32 %v1576, %v1590
  %v1592 = vrot.slane %v1591, 2
  %v1593 = vadd.f32 %v1591, %v1592
  %v1594 = vrot.slane %v1593, 1
  %v1595 = vadd.f32 %v1593, %v1594
  %v1596 = vrot.slane %v1577, 4
  %v1597 = vadd.f32 %v1577, %v1596
  %v1598 = vrot.slane %v1597, 2
  %v1599 = vadd.f32 %v1597, %v1598
  %v1600 = vrot.slane %v1599, 1
  %v1601 = vadd.f32 %v1599, %v1600
  %v1602 = vadd.f32 %v1570, %v1583
  %v1603 = vadd.f32 %v1571, %v1589
  %v1604 = vadd.f32 %v1572, %v1595
  %v1605 = vadd.f32 %v1573, %v1601
  %v1606 = vmul.f32 %v355, %v1095
  %v1607 = vmul.f32 %v357, %v1097
  %v1608 = vmul.f32 %v414, %v1154
  %v1609 = vmul.f32 %v416, %v1156
  %v1610 = vrot.slane %v1606, 4
  %v1611 = vadd.f32 %v1606, %v1610
  %v1612 = vrot.slane %v1611, 2
  %v1613 = vadd.f32 %v1611, %v1612
  %v1614 = vrot.slane %v1613, 1
  %v1615 = vadd.f32 %v1613, %v1614
  %v1616 = vrot.slane %v1607, 4
  %v1617 = vadd.f32 %v1607, %v1616
  %v1618 = vrot.slane %v1617, 2
  %v1619 = vadd.f32 %v1617, %v1618
  %v1620 = vrot.slane %v1619, 1
  %v1621 = vadd.f32 %v1619, %v1620
  %v1622 = vrot.slane %v1608, 4
  %v1623 = vadd.f32 %v1608, %v1622
  %v1624 = vrot.slane %v1623, 2
  %v1625 = vadd.f32 %v1623, %v1624
  %v1626 = vrot.slane %v1625, 1
  %v1627 = vadd.f32 %v1625, %v1626
  %v1628 = vrot.slane %v1609, 4
  %v1629 = vadd.f32 %v1609, %v1628
  %v1630 = vrot.slane %v1629, 2
  %v1631 = vadd.f32 %v1629, %v1630
  %v1632 = vrot.slane %v1631, 1
  %v1633 = vadd.f32 %v1631, %v1632
  %v1634 = vadd.f32 %v1602, %v1615
  %v1635 = vadd.f32 %v1603, %v1621
  %v1636 = vadd.f32 %v1604, %v1627
  %v1637 = vadd.f32 %v1605, %v1633
  %v1638 = vmul.f32 %v359, %v1469
  %v1639 = vmul.f32 %v361, %v1471
  %v1640 = vmul.f32 %v418, %v1528
  %v1641 = vmul.f32 %v420, %v1530
  %v1642 = vrot.slane %v1638, 4
  %v1643 = vadd.f32 %v1638, %v1642
  %v1644 = vrot.slane %v1643, 2
  %v1645 = vadd.f32 %v1643, %v1644
  %v1646 = vrot.slane %v1645, 1
  %v1647 = vadd.f32 %v1645, %v1646
  %v1648 = vrot.slane %v1639, 4
  %v1649 = vadd.f32 %v1639, %v1648
  %v1650 = vrot.slane %v1649, 2
  %v1651 = vadd.f32 %v1649, %v1650
  %v1652 = vrot.slane %v1651, 1
  %v1653 = vadd.f32 %v1651, %v1652
  %v1654 = vrot.slane %v1640, 4
  %v1655 = vadd.f32 %v1640, %v1654
  %v1656 = vrot.slane %v1655, 2
  %v1657 = vadd.f32 %v1655, %v1656
  %v1658 = vrot.slane %v1657, 1
  %v1659 = vadd.f32 %v1657, %v1658
  %v1660 = vrot.slane %v1641, 4
  %v1661 = vadd.f32 %v1641, %v1660
  %v1662 = vrot.slane %v1661, 2
  %v1663 = vadd.f32 %v1661, %v1662
  %v1664 = vrot.slane %v1663, 1
  %v1665 = vadd.f32 %v1663, %v1664
  %v1666 = vadd.f32 %v1634, %v1647
  %v1667 = vadd.f32 %v1635, %v1653
  %v1668 = vadd.f32 %v1636, %v1659
  %v1669 = vadd.f32 %v1637, %v1665
  %v1670 = vmul.f32 %v729, %v1099
  %v1671 = vmul.f32 %v731, %v1101
  %v1672 = vmul.f32 %v788, %v1158
  %v1673 = vmul.f32 %v790, %v1160
  %v1674 = vrot.slane %v1670, 4
  %v1675 = vadd.f32 %v1670, %v1674
  %v1676 = vrot.slane %v1675, 2
  %v1677 = vadd.f32 %v1675, %v1676
  %v1678 = vrot.slane %v1677, 1
  %v1679 = vadd.f32 %v1677, %v1678
  %v1680 = vrot.slane %v1671, 4
  %v1681 = vadd.f32 %v1671, %v1680
  %v1682 = vrot.slane %v1681, 2
  %v1683 = vadd.f32 %v1681, %v1682
  %v1684 = vrot.slane %v1683, 1
  %v1685 = vadd.f32 %v1683, %v1684
  %v1686 = vrot.slane %v1672, 4
  %v1687 = vadd.f32 %v1672, %v1686
  %v1688 = vrot.slane %v1687, 2
  %v1689 = vadd.f32 %v1687, %v1688
  %v1690 = vrot.slane %v1689, 1
  %v1691 = vadd.f32 %v1689, %v1690
  %v1692 = vrot.slane %v1673, 4
  %v1693 = vadd.f32 %v1673, %v1692
  %v1694 = vrot.slane %v1693, 2
  %v1695 = vadd.f32 %v1693, %v1694
  %v1696 = vrot.slane %v1695, 1
  %v1697 = vadd.f32 %v1695, %v1696
  %v1698 = vadd.f32 %v1666, %v1679
  %v1699 = vadd.f32 %v1667, %v1685
  %v1700 = vadd.f32 %v1668, %v1691
  %v1701 = vadd.f32 %v1669, %v1697
  %v1702 = vmul.f32 %v733, %v1473
  %v1703 = vmul.f32 %v735, %v1475
  %v1704 = vmul.f32 %v792, %v1532
  %v1705 = vmul.f32 %v794, %v1534
  %v1706 = vrot.slane %v1702, 4
  %v1707 = vadd.f32 %v1702, %v1706
  %v1708 = vrot.slane %v1707, 2
  %v1709 = vadd.f32 %v1707, %v1708
  %v1710 = vrot.slane %v1709, 1
  %v1711 = vadd.f32 %v1709, %v1710
  %v1712 = vrot.slane %v1703, 4
  %v1713 = vadd.f32 %v1703, %v1712
  %v1714 = vrot.slane %v1713, 2
  %v1715 = vadd.f32 %v1713, %v1714
  %v1716 = vrot.slane %v1715, 1
  %v1717 = vadd.f32 %v1715, %v1716
  %v1718 = vrot.slane %v1704, 4
  %v1719 = vadd.f32 %v1704, %v1718
  %v1720 = vrot.slane %v1719, 2
  %v1721 = vadd.f32 %v1719, %v1720
  %v1722 = vrot.slane %v1721, 1
  %v1723 = vadd.f32 %v1721, %v1722
  %v1724 = vrot.slane %v1705, 4
  %v1725 = vadd.f32 %v1705, %v1724
  %v1726 = vrot.slane %v1725, 2
  %v1727 = vadd.f32 %v1725, %v1726
  %v1728 = vrot.slane %v1727, 1
  %v1729 = vadd.f32 %v1727, %v1728
  %v1730 = vadd.f32 %v1698, %v1711
  %v1731 = vadd.f32 %v1699, %v1717
  %v1732 = vadd.f32 %v1700, %v1723
  %v1733 = vadd.f32 %v1701, %v1729
  %v1734 = vmul.f32 %v1107, %v1479
  %v1735 = vmul.f32 %v1109, %v1481
  %v1736 = vmul.f32 %v1166, %v1538
  %v1737 = vmul.f32 %v1168, %v1540
  %v1738 = vrot.slane %v1734, 4
  %v1739 = vadd.f32 %v1734, %v1738
  %v1740 = vrot.slane %v1739, 2
  %v1741 = vadd.f32 %v1739, %v1740
  %v1742 = vrot.slane %v1741, 1
  %v1743 = vadd.f32 %v1741, %v1742
  %v1744 = vrot.slane %v1735, 4
  %v1745 = vadd.f32 %v1735, %v1744
  %v1746 = vrot.slane %v1745, 2
  %v1747 = vadd.f32 %v1745, %v1746
  %v1748 = vrot.slane %v1747, 1
  %v1749 = vadd.f32 %v1747, %v1748
  %v1750 = vrot.slane %v1736, 4
  %v1751 = vadd.f32 %v1736, %v1750
  %v1752 = vrot.slane %v1751, 2
  %v1753 = vadd.f32 %v1751, %v1752
  %v1754 = vrot.slane %v1753, 1
  %v1755 = vadd.f32 %v1753, %v1754
  %v1756 = vrot.slane %v1737, 4
  %v1757 = vadd.f32 %v1737, %v1756
  %v1758 = vrot.slane %v1757, 2
  %v1759 = vadd.f32 %v1757, %v1758
  %v1760 = vrot.slane %v1759, 1
  %v1761 = vadd.f32 %v1759, %v1760
  %v1762 = vadd.f32 %v1730, %v1743
  %v1763 = vadd.f32 %v1731, %v1749
  %v1764 = vadd.f32 %v1732, %v1755
  %v1765 = vadd.f32 %v1733, %v1761
  %v1766 = vxor.u32 %v1762, 2147483648
  %v1767 = vxor.u32 %v1763, 2147483648
  %v1768 = vxor.u32 %v1764, 2147483648
  %v1769 = vxor.u32 %v1765, 2147483648
  %v1770 = vmul.f32 %v1766, 1.442695
  %v1771 = vpow.pop %v1770
  %v1772 = vmul.f32 %v1767, 1.442695
  %v1773 = vpow.pop %v1772
  %v1774 = vmul.f32 %v1768, 1.442695
  %v1775 = vpow.pop %v1774
  %v1776 = vmul.f32 %v1769, 1.442695
  %v1777 = vpow.pop %v1776
  %v1778 = vadd.f32 %v1771, 1.0
  %v1779 = vadd.f32 %v1773, 1.0
  %v1780 = vadd.f32 %v1775, 1.0
  %v1781 = vadd.f32 %v1777, 1.0
  %v1782 = vrcp.pop %v1778
  %v1783 = vmul.f32 1.0, %v1782
  %v1784 = vrcp.pop %v1779
  %v1785 = vmul.f32 1.0, %v1784
  %v1786 = vrcp.pop %v1780
  %v1787 = vmul.f32 1.0, %v1786
  %v1788 = vrcp.pop %v1781
  %v1789 = vmul.f32 1.0, %v1788
  %v1794 = vcombine.low %v1783, %v1785
  %v1795 = vcombine.low %v1787, %v1789
  %v1797 = vunpack.c.l.s4 1966171168
  %v1798 = vunpack.c.0.s8 %v1797
  %v1799 = vlaneseq
  %v1800 = vshrl.u32 %v1799, 7
  %v1801 = vsub.s32 %v1798, %v1800
  %v1802 = vrot.slane %v1794, %v1801
  %v1804 = vunpack.c.l.s4 1966171168
  %v1805 = vunpack.c.0.s8 %v1804
  %v1806 = vlaneseq
  %v1807 = vshrl.u32 %v1806, 7
  %v1808 = vsub.s32 %v1805, %v1807
  %v1809 = vrot.slane %v1795, %v1808
  %v1810 = vcombine.low %v1802, %v1809
  %v1812 = vunpack.c.l.s4 1966171168
  %v1813 = vunpack.c.0.s8 %v1812
  %v1814 = vlaneseq
  %v1815 = vshrl.u32 %v1814, 7
  %v1816 = vsub.s32 %v1813, %v1815
  %v1817 = vrot.slane %v1810, %v1816
  %v1819 = vlaneseq
  %vm1820 = vcmp.ge.s32.totalorder %v1819, 0
  %vm1821 = vcmp.lt.s32.totalorder %v1819, 512
  %vm1822 = vmand %vm1820, %vm1821
  %1823 = vst.msk [vmem:[%s3] sm:$0xf] %vm1822, %v1817
  // Predicated region
  $region14: #{ffm_forward.1} parent=0 // pred_check
    _
  $region15: #{ffm_forward.1} parent=0 // pred_check_branch
    %1825 = sbr.rel (0) target = $region17
  $region16: #{ffm_forward.1} parent=0 // pred_region
    _
  $region17: #{ffm_forward.1} parent=0 // pred_fallthru
    _
  // Predicated region
  $region18: #{ffm_forward.1} parent=0 // pred_check
    _
  $region19: #{ffm_forward.1} parent=0 // pred_check_branch
    %1827 = sbr.rel (0) target = $region21
  $region20: #{ffm_forward.1} parent=0 // pred_region
    _
  $region21: #{ffm_forward.1} parent=0 // pred_fallthru
    _

</llo_original>
